<compile_context>
chip_gen: v7x
topology: tpu7x:2x2x1
jax: 0.10.0
libtpu: 0.0.40
codegen_flags: <defaults>
</compile_context>

<pallas_src>
import jax
import jax.numpy as jnp
from jax.experimental import pallas as pl
from jax.experimental.pallas import tpu as pltpu

M = 5  # number of gated inputs in Atten_block


def _make_kernel(m):
    """Kernel over one (batch, pixel-tile) grid point.

    refs layout:
      refs[0:m]        input blocks, each (C_i, TP)
      refs[m:2m]       BN-folded conv weights, each (F_out, C_i)
      refs[2m:3m]      per-branch shifts (bias + BN), each (F_out, 1)
      refs[3m]         psi weight (1, F_out)
      refs[3m+1]       psi shift  (1, 1)
      refs[3m+2]       output block (C_0, TP)
    """

    def kernel(*refs):
        in_refs = refs[:m]
        w_refs = refs[m:2 * m]
        s_refs = refs[2 * m:3 * m]
        wp_ref = refs[3 * m]
        sp_ref = refs[3 * m + 1]
        out_ref = refs[3 * m + 2]

        res = None
        for i in range(m):
            # (F_out, C_i) @ (C_i, TP) -> (F_out, TP), f32 accumulation on MXU.
            h = jnp.dot(w_refs[i][...], in_refs[i][...],
                        preferred_element_type=jnp.float32)
            h = jnp.maximum(h + s_refs[i][...], 0.0)  # per-branch BN shift + ReLU
            res = h if res is None else res + h

        # psi branch: (1, F_out) @ (F_out, TP) -> (1, TP), lane-dense.
        psi = jnp.dot(wp_ref[...], res, preferred_element_type=jnp.float32)
        psi = jax.nn.sigmoid(psi + sp_ref[...])

        # Gate the first input; psi broadcasts over the channel (sublane) axis.
        out_ref[...] = (in_refs[0][...] * psi).astype(out_ref.dtype)

    return kernel


def _fold_bn(conv_w, conv_b, gamma, beta, mean, var, eps=1e-5):
    """Fold conv bias + eval-mode BatchNorm into the conv weight and a shift."""
    scale = gamma / jnp.sqrt(var + eps)           # (C_out,)
    w_fold = conv_w * scale[:, None]              # (C_out, C_in)
    shift = beta + (conv_b - mean) * scale        # (C_out,)
    return w_fold, shift


def init_params(key, in_channels, out_channel):
    m = len(in_channels)
    ks = jax.random.split(key, 6 * (m + 1))
    p = {}
    k = 0

    def bn(prefix, cdim, k):
        p[f"gamma{prefix}"] = 1.0 + 0.1 * jax.random.normal(ks[k], (cdim,), jnp.float32)
        p[f"beta{prefix}"] = 0.1 * jax.random.normal(ks[k + 1], (cdim,), jnp.float32)
        p[f"mean{prefix}"] = 0.1 * jax.random.normal(ks[k + 2], (cdim,), jnp.float32)
        p[f"var{prefix}"] = jax.random.uniform(ks[k + 3], (cdim,), jnp.float32,
                                               minval=0.5, maxval=1.5)
        return k + 4

    for i, cin in enumerate(in_channels):
        p[f"w{i}"] = 0.2 * jax.random.normal(ks[k], (out_channel, cin), jnp.float32)
        p[f"b{i}"] = 0.1 * jax.random.normal(ks[k + 1], (out_channel,), jnp.float32)
        k += 2
        k = bn(str(i), out_channel, k)

    p["wp"] = 0.2 * jax.random.normal(ks[k], (1, out_channel), jnp.float32)
    p["bp"] = 0.1 * jax.random.normal(ks[k + 1], (1,), jnp.float32)
    k += 2
    bn("_p", 1, k)
    return p


def atten_block(inputs, params, *, max_tp=2048, vmem_io_budget=24 << 20):
    """inputs: list of M arrays (N, C_i, H, W); returns (N, C_0, H, W)."""
    m = len(inputs)
    N, C0, H, W = inputs[0].shape
    HW = H * W
    f_out = params["w0"].shape[0]
    cins = [a.shape[1] for a in inputs]
    dtype = inputs[0].dtype
    itemsize = jnp.dtype(dtype).itemsize

    # Fold conv bias + BN(eval) into weights / per-channel shifts (wrapper-side).
    wf, sf = [], []
    for i in range(m):
        w, s = _fold_bn(params[f"w{i}"], params[f"b{i}"],
                        params[f"gamma{i}"], params[f"beta{i}"],
                        params[f"mean{i}"], params[f"var{i}"])
        wf.append(w)
        sf.append(s.reshape(f_out, 1))
    wpf, spf = _fold_bn(params["wp"], params["bp"],
                        params["gamma_p"], params["beta_p"],
                        params["mean_p"], params["var_p"])
    spf = spf.reshape(1, 1)

    # NCHW -> (N, C, H*W): a pure view, no transpose / extra HBM traffic.
    flat = [a.reshape(a.shape[0], a.shape[1], HW) for a in inputs]

    # Pick the largest pixel tile (multiple of 128) under the VMEM I/O budget,
    # preferring one that divides H*W so no padding copy is needed.
    per_pix = 2 * (sum(cins) + C0) * itemsize + 3 * f_out * 4
    cap = max(128, min(max_tp, (vmem_io_budget // per_pix) // 128 * 128))
    tp = None
    t = 128
    while t <= min(HW, cap):
        if HW % t == 0:
            tp = t
        t += 128
    if tp is None:
        # Ragged spatial size: pad the pixel axis once (padded pixels give
        # psi * 0 = 0 and are sliced away below).
        tp = min(cap, pl.cdiv(HW, 128) * 128)
        hw_p = pl.cdiv(HW, tp) * tp
        flat = [jnp.pad(a, ((0, 0), (0, 0), (0, hw_p - HW))) for a in flat]
    else:
        hw_p = HW

    grid = (N, hw_p // tp)

    def pix_spec(c):
        return pl.BlockSpec((None, c, tp), lambda n, p: (n, 0, p))

    def full_spec(shape):
        return pl.BlockSpec(shape, lambda n, p: (0,) * len(shape))

    in_specs = ([pix_spec(c) for c in cins]
                + [full_spec(w.shape) for w in wf]
                + [full_spec((f_out, 1)) for _ in sf]
                + [full_spec((1, f_out)), full_spec((1, 1))])

    out = pl.pallas_call(
        _make_kernel(m),
        out_shape=jax.ShapeDtypeStruct((N, C0, hw_p), dtype),
        grid_spec=pltpu.PrefetchScalarGridSpec(
            num_scalar_prefetch=0,
            grid=grid,
            in_specs=in_specs,
            out_specs=pix_spec(C0),
        ),
        compiler_params=pltpu.CompilerParams(
            dimension_semantics=("parallel", "parallel"),
            vmem_limit_bytes=48 * 1024 * 1024,
        ),
    )(*flat, *wf, *sf, wpf, spf)

    if hw_p != HW:
        out = out[:, :, :HW]
    return out.reshape(N, C0, H, W)


def atten_block_ref(inputs, params, eps=1e-5):
    """Pure-JAX reference with explicit (un-folded) eval-mode BatchNorm."""
    def bn(y, prefix):
        scale = params[f"gamma{prefix}"] / jnp.sqrt(params[f"var{prefix}"] + eps)
        return ((y - params[f"mean{prefix}"][None, :, None, None])
                * scale[None, :, None, None]
                + params[f"beta{prefix}"][None, :, None, None])

    outs = []
    for i, a in enumerate(inputs):
        y = jnp.einsum("oc,nchw->nohw", params[f"w{i}"], a)
        y = y + params[f"b{i}"][None, :, None, None]
        outs.append(jnp.maximum(bn(y, str(i)), 0.0))

    res = outs[0]
    for o in outs[1:]:
        res = res + o

    y = jnp.einsum("oc,nchw->nohw", params["wp"], res)
    y = y + params["bp"][None, :, None, None]
    psi = jax.nn.sigmoid(bn(y, "_p"))
    return psi * inputs[0]


if __name__ == "__main__":
    key = jax.random.PRNGKey(0)
    in_channels = (4, 8, 16, 8, 4)
    out_channel = 8
    N, H, W = 2, 16, 16

    k_in, k_p = jax.random.split(key)
    ks = jax.random.split(k_in, len(in_channels))
    inputs = [jax.random.normal(ks[i], (N, c, H, W), jnp.float32)
              for i, c in enumerate(in_channels)]
    params = init_params(k_p, in_channels, out_channel)

    out = atten_block(inputs, params)
    out = jax.block_until_ready(out)

    ref = atten_block_ref(inputs, params)
    assert out.shape == (N, in_channels[0], H, W)
    assert jnp.allclose(out, ref, atol=1e-5, rtol=1e-5), "mismatch vs reference"

    print("KERNEL_OK")
</pallas_src>

<mosaic_0001>
module attributes {stable_mosaic.version = 11 : i64} {
  func.func @kernel(%arg0: i32, %arg1: i32, %arg2: memref<1x4x256xf32, #tpu.memory_space<vmem>>, %arg3: memref<1x8x256xf32, #tpu.memory_space<vmem>>, %arg4: memref<1x16x256xf32, #tpu.memory_space<vmem>>, %arg5: memref<1x8x256xf32, #tpu.memory_space<vmem>>, %arg6: memref<1x4x256xf32, #tpu.memory_space<vmem>>, %arg7: memref<8x4xf32, #tpu.memory_space<vmem>>, %arg8: memref<8x8xf32, #tpu.memory_space<vmem>>, %arg9: memref<8x16xf32, #tpu.memory_space<vmem>>, %arg10: memref<8x8xf32, #tpu.memory_space<vmem>>, %arg11: memref<8x4xf32, #tpu.memory_space<vmem>>, %arg12: memref<8x1xf32, #tpu.memory_space<vmem>>, %arg13: memref<8x1xf32, #tpu.memory_space<vmem>>, %arg14: memref<8x1xf32, #tpu.memory_space<vmem>>, %arg15: memref<8x1xf32, #tpu.memory_space<vmem>>, %arg16: memref<8x1xf32, #tpu.memory_space<vmem>>, %arg17: memref<1x8xf32, #tpu.memory_space<vmem>>, %arg18: memref<1x1xf32, #tpu.memory_space<vmem>>, %arg19: memref<1x4x256xf32, #tpu.memory_space<vmem>>) attributes {dimension_semantics = [#tpu.dimension_semantics<parallel>, #tpu.dimension_semantics<parallel>], iteration_bounds = array<i64: 2, 1>, scalar_prefetch = 0 : i64, scratch_operands = 0 : i64, tpu.core_type = #tpu.core_type<tc>, window_params = [{transform_indices = @transform_0, window_bounds = array<i64: 1, 4, 256>}, {transform_indices = @transform_1, window_bounds = array<i64: 1, 8, 256>}, {transform_indices = @transform_2, window_bounds = array<i64: 1, 16, 256>}, {transform_indices = @transform_3, window_bounds = array<i64: 1, 8, 256>}, {transform_indices = @transform_4, window_bounds = array<i64: 1, 4, 256>}, {pipeline_mode = #tpu.pipeline_mode<synchronous>, transform_indices = @transform_5, window_bounds = array<i64: 8, 4>}, {pipeline_mode = #tpu.pipeline_mode<synchronous>, transform_indices = @transform_6, window_bounds = array<i64: 8, 8>}, {pipeline_mode = #tpu.pipeline_mode<synchronous>, transform_indices = @transform_7, window_bounds = array<i64: 8, 16>}, {pipeline_mode = #tpu.pipeline_mode<synchronous>, transform_indices = @transform_8, window_bounds = array<i64: 8, 8>}, {pipeline_mode = #tpu.pipeline_mode<synchronous>, transform_indices = @transform_9, window_bounds = array<i64: 8, 4>}, {pipeline_mode = #tpu.pipeline_mode<synchronous>, transform_indices = @transform_10, window_bounds = array<i64: 8, 1>}, {pipeline_mode = #tpu.pipeline_mode<synchronous>, transform_indices = @transform_11, window_bounds = array<i64: 8, 1>}, {pipeline_mode = #tpu.pipeline_mode<synchronous>, transform_indices = @transform_12, window_bounds = array<i64: 8, 1>}, {pipeline_mode = #tpu.pipeline_mode<synchronous>, transform_indices = @transform_13, window_bounds = array<i64: 8, 1>}, {pipeline_mode = #tpu.pipeline_mode<synchronous>, transform_indices = @transform_14, window_bounds = array<i64: 8, 1>}, {pipeline_mode = #tpu.pipeline_mode<synchronous>, transform_indices = @transform_15, window_bounds = array<i64: 1, 8>}, {pipeline_mode = #tpu.pipeline_mode<synchronous>, transform_indices = @transform_16, window_bounds = array<i64: 1, 1>}, {transform_indices = @transform_17, window_bounds = array<i64: 1, 4, 256>}]} {
    %c0 = arith.constant 0 : index
    %c0_0 = arith.constant 0 : index
    %0 = vector.load %arg7[%c0, %c0_0] : memref<8x4xf32, #tpu.memory_space<vmem>>, vector<8x4xf32>
    %c0_1 = arith.constant 0 : index
    %c0_2 = arith.constant 0 : index
    %c0_3 = arith.constant 0 : index
    %1 = vector.load %arg2[%c0_1, %c0_2, %c0_3] : memref<1x4x256xf32, #tpu.memory_space<vmem>>, vector<1x4x256xf32>
    %2 = vector.shape_cast %1 : vector<1x4x256xf32> to vector<4x256xf32>
    %cst = arith.constant dense<0.000000e+00> : vector<8x256xf32>
    %3 = tpu.matmul %0, %2, %cst {dimension_numbers = #tpu.dot_dimension_numbers<[1], [0], [0], [1], [0, 0, 1, 1], [], []>} : vector<8x4xf32>, vector<4x256xf32>, vector<8x256xf32> -> vector<8x256xf32>
    %c0_4 = arith.constant 0 : index
    %c0_5 = arith.constant 0 : index
    %4 = vector.load %arg12[%c0_4, %c0_5] : memref<8x1xf32, #tpu.memory_space<vmem>>, vector<8x1xf32>
    %5 = vector.broadcast %4 : vector<8x1xf32> to vector<8x256xf32>
    %6 = arith.addf %3, %5 : vector<8x256xf32>
    %cst_6 = arith.constant 0.000000e+00 : f32
    %7 = vector.broadcast %cst_6 : f32 to vector<8x256xf32>
    %8 = arith.maximumf %6, %7 : vector<8x256xf32>
    %c0_7 = arith.constant 0 : index
    %c0_8 = arith.constant 0 : index
    %9 = vector.load %arg8[%c0_7, %c0_8] : memref<8x8xf32, #tpu.memory_space<vmem>>, vector<8x8xf32>
    %c0_9 = arith.constant 0 : index
    %c0_10 = arith.constant 0 : index
    %c0_11 = arith.constant 0 : index
    %10 = vector.load %arg3[%c0_9, %c0_10, %c0_11] : memref<1x8x256xf32, #tpu.memory_space<vmem>>, vector<1x8x256xf32>
    %11 = vector.shape_cast %10 : vector<1x8x256xf32> to vector<8x256xf32>
    %cst_12 = arith.constant dense<0.000000e+00> : vector<8x256xf32>
    %12 = tpu.matmul %9, %11, %cst_12 {dimension_numbers = #tpu.dot_dimension_numbers<[1], [0], [0], [1], [0, 0, 1, 1], [], []>} : vector<8x8xf32>, vector<8x256xf32>, vector<8x256xf32> -> vector<8x256xf32>
    %c0_13 = arith.constant 0 : index
    %c0_14 = arith.constant 0 : index
    %13 = vector.load %arg13[%c0_13, %c0_14] : memref<8x1xf32, #tpu.memory_space<vmem>>, vector<8x1xf32>
    %14 = vector.broadcast %13 : vector<8x1xf32> to vector<8x256xf32>
    %15 = arith.addf %12, %14 : vector<8x256xf32>
    %cst_15 = arith.constant 0.000000e+00 : f32
    %16 = vector.broadcast %cst_15 : f32 to vector<8x256xf32>
    %17 = arith.maximumf %15, %16 : vector<8x256xf32>
    %18 = arith.addf %8, %17 : vector<8x256xf32>
    %c0_16 = arith.constant 0 : index
    %c0_17 = arith.constant 0 : index
    %19 = vector.load %arg9[%c0_16, %c0_17] : memref<8x16xf32, #tpu.memory_space<vmem>>, vector<8x16xf32>
    %c0_18 = arith.constant 0 : index
    %c0_19 = arith.constant 0 : index
    %c0_20 = arith.constant 0 : index
    %20 = vector.load %arg4[%c0_18, %c0_19, %c0_20] : memref<1x16x256xf32, #tpu.memory_space<vmem>>, vector<1x16x256xf32>
    %21 = vector.shape_cast %20 : vector<1x16x256xf32> to vector<16x256xf32>
    %cst_21 = arith.constant dense<0.000000e+00> : vector<8x256xf32>
    %22 = tpu.matmul %19, %21, %cst_21 {dimension_numbers = #tpu.dot_dimension_numbers<[1], [0], [0], [1], [0, 0, 1, 1], [], []>} : vector<8x16xf32>, vector<16x256xf32>, vector<8x256xf32> -> vector<8x256xf32>
    %c0_22 = arith.constant 0 : index
    %c0_23 = arith.constant 0 : index
    %23 = vector.load %arg14[%c0_22, %c0_23] : memref<8x1xf32, #tpu.memory_space<vmem>>, vector<8x1xf32>
    %24 = vector.broadcast %23 : vector<8x1xf32> to vector<8x256xf32>
    %25 = arith.addf %22, %24 : vector<8x256xf32>
    %cst_24 = arith.constant 0.000000e+00 : f32
    %26 = vector.broadcast %cst_24 : f32 to vector<8x256xf32>
    %27 = arith.maximumf %25, %26 : vector<8x256xf32>
    %28 = arith.addf %18, %27 : vector<8x256xf32>
    %c0_25 = arith.constant 0 : index
    %c0_26 = arith.constant 0 : index
    %29 = vector.load %arg10[%c0_25, %c0_26] : memref<8x8xf32, #tpu.memory_space<vmem>>, vector<8x8xf32>
    %c0_27 = arith.constant 0 : index
    %c0_28 = arith.constant 0 : index
    %c0_29 = arith.constant 0 : index
    %30 = vector.load %arg5[%c0_27, %c0_28, %c0_29] : memref<1x8x256xf32, #tpu.memory_space<vmem>>, vector<1x8x256xf32>
    %31 = vector.shape_cast %30 : vector<1x8x256xf32> to vector<8x256xf32>
    %cst_30 = arith.constant dense<0.000000e+00> : vector<8x256xf32>
    %32 = tpu.matmul %29, %31, %cst_30 {dimension_numbers = #tpu.dot_dimension_numbers<[1], [0], [0], [1], [0, 0, 1, 1], [], []>} : vector<8x8xf32>, vector<8x256xf32>, vector<8x256xf32> -> vector<8x256xf32>
    %c0_31 = arith.constant 0 : index
    %c0_32 = arith.constant 0 : index
    %33 = vector.load %arg15[%c0_31, %c0_32] : memref<8x1xf32, #tpu.memory_space<vmem>>, vector<8x1xf32>
    %34 = vector.broadcast %33 : vector<8x1xf32> to vector<8x256xf32>
    %35 = arith.addf %32, %34 : vector<8x256xf32>
    %cst_33 = arith.constant 0.000000e+00 : f32
    %36 = vector.broadcast %cst_33 : f32 to vector<8x256xf32>
    %37 = arith.maximumf %35, %36 : vector<8x256xf32>
    %38 = arith.addf %28, %37 : vector<8x256xf32>
    %c0_34 = arith.constant 0 : index
    %c0_35 = arith.constant 0 : index
    %39 = vector.load %arg11[%c0_34, %c0_35] : memref<8x4xf32, #tpu.memory_space<vmem>>, vector<8x4xf32>
    %c0_36 = arith.constant 0 : index
    %c0_37 = arith.constant 0 : index
    %c0_38 = arith.constant 0 : index
    %40 = vector.load %arg6[%c0_36, %c0_37, %c0_38] : memref<1x4x256xf32, #tpu.memory_space<vmem>>, vector<1x4x256xf32>
    %41 = vector.shape_cast %40 : vector<1x4x256xf32> to vector<4x256xf32>
    %cst_39 = arith.constant dense<0.000000e+00> : vector<8x256xf32>
    %42 = tpu.matmul %39, %41, %cst_39 {dimension_numbers = #tpu.dot_dimension_numbers<[1], [0], [0], [1], [0, 0, 1, 1], [], []>} : vector<8x4xf32>, vector<4x256xf32>, vector<8x256xf32> -> vector<8x256xf32>
    %c0_40 = arith.constant 0 : index
    %c0_41 = arith.constant 0 : index
    %43 = vector.load %arg16[%c0_40, %c0_41] : memref<8x1xf32, #tpu.memory_space<vmem>>, vector<8x1xf32>
    %44 = vector.broadcast %43 : vector<8x1xf32> to vector<8x256xf32>
    %45 = arith.addf %42, %44 : vector<8x256xf32>
    %cst_42 = arith.constant 0.000000e+00 : f32
    %46 = vector.broadcast %cst_42 : f32 to vector<8x256xf32>
    %47 = arith.maximumf %45, %46 : vector<8x256xf32>
    %48 = arith.addf %38, %47 : vector<8x256xf32>
    %c0_43 = arith.constant 0 : index
    %c0_44 = arith.constant 0 : index
    %49 = vector.load %arg17[%c0_43, %c0_44] : memref<1x8xf32, #tpu.memory_space<vmem>>, vector<1x8xf32>
    %cst_45 = arith.constant dense<0.000000e+00> : vector<1x256xf32>
    %50 = tpu.matmul %49, %48, %cst_45 {dimension_numbers = #tpu.dot_dimension_numbers<[1], [0], [0], [1], [0, 0, 1, 1], [], []>} : vector<1x8xf32>, vector<8x256xf32>, vector<1x256xf32> -> vector<1x256xf32>
    %c0_46 = arith.constant 0 : index
    %c0_47 = arith.constant 0 : index
    %51 = vector.load %arg18[%c0_46, %c0_47] : memref<1x1xf32, #tpu.memory_space<vmem>>, vector<1x1xf32>
    %52 = vector.broadcast %51 : vector<1x1xf32> to vector<1x256xf32>
    %53 = arith.addf %50, %52 : vector<1x256xf32>
    %54 = arith.negf %53 : vector<1x256xf32>
    %55 = math.exp %54 : vector<1x256xf32>
    %cst_48 = arith.constant 1.000000e+00 : f32
    %56 = vector.broadcast %cst_48 : f32 to vector<1x256xf32>
    %57 = arith.addf %56, %55 : vector<1x256xf32>
    %58 = arith.divf %56, %57 : vector<1x256xf32>
    %c0_49 = arith.constant 0 : index
    %c0_50 = arith.constant 0 : index
    %c0_51 = arith.constant 0 : index
    %59 = vector.load %arg2[%c0_49, %c0_50, %c0_51] : memref<1x4x256xf32, #tpu.memory_space<vmem>>, vector<1x4x256xf32>
    %60 = vector.shape_cast %59 : vector<1x4x256xf32> to vector<4x256xf32>
    %61 = vector.broadcast %58 : vector<1x256xf32> to vector<4x256xf32>
    %62 = arith.mulf %60, %61 : vector<4x256xf32>
    %c0_52 = arith.constant 0 : index
    %c0_53 = arith.constant 0 : index
    %c0_54 = arith.constant 0 : index
    %63 = vector.load %arg19[%c0_52, %c0_53, %c0_54] : memref<1x4x256xf32, #tpu.memory_space<vmem>>, vector<1x4x256xf32>
    %64 = vector.shape_cast %63 : vector<1x4x256xf32> to vector<4x256xf32>
    %65 = vector.shape_cast %62 : vector<4x256xf32> to vector<1x4x256xf32>
    tpu.vector_store %arg19[%c0_52, %c0_53, %c0_54], %65 {strides = array<i32>} : memref<1x4x256xf32, #tpu.memory_space<vmem>>, vector<1x4x256xf32>,
    return
  }
  func.func @transform_0(%arg0: i32, %arg1: i32) -> (i32, i32, i32) {
    %c0_i32 = arith.constant 0 : i32
    %c0_i32_0 = arith.constant 0 : i32
    return %arg0, %c0_i32, %arg1 : i32, i32, i32
  }
  func.func @transform_1(%arg0: i32, %arg1: i32) -> (i32, i32, i32) {
    %c0_i32 = arith.constant 0 : i32
    %c0_i32_0 = arith.constant 0 : i32
    return %arg0, %c0_i32, %arg1 : i32, i32, i32
  }
  func.func @transform_2(%arg0: i32, %arg1: i32) -> (i32, i32, i32) {
    %c0_i32 = arith.constant 0 : i32
    %c0_i32_0 = arith.constant 0 : i32
    return %arg0, %c0_i32, %arg1 : i32, i32, i32
  }
  func.func @transform_3(%arg0: i32, %arg1: i32) -> (i32, i32, i32) {
    %c0_i32 = arith.constant 0 : i32
    %c0_i32_0 = arith.constant 0 : i32
    return %arg0, %c0_i32, %arg1 : i32, i32, i32
  }
  func.func @transform_4(%arg0: i32, %arg1: i32) -> (i32, i32, i32) {
    %c0_i32 = arith.constant 0 : i32
    %c0_i32_0 = arith.constant 0 : i32
    return %arg0, %c0_i32, %arg1 : i32, i32, i32
  }
  func.func @transform_5(%arg0: i32, %arg1: i32) -> (i32, i32) {
    %c0_i32 = arith.constant 0 : i32
    %c0_i32_0 = arith.constant 0 : i32
    %c0_i32_1 = arith.constant 0 : i32
    return %c0_i32, %c0_i32_0 : i32, i32
  }
  func.func @transform_6(%arg0: i32, %arg1: i32) -> (i32, i32) {
    %c0_i32 = arith.constant 0 : i32
    %c0_i32_0 = arith.constant 0 : i32
    %c0_i32_1 = arith.constant 0 : i32
    return %c0_i32, %c0_i32_0 : i32, i32
  }
  func.func @transform_7(%arg0: i32, %arg1: i32) -> (i32, i32) {
    %c0_i32 = arith.constant 0 : i32
    %c0_i32_0 = arith.constant 0 : i32
    %c0_i32_1 = arith.constant 0 : i32
    return %c0_i32, %c0_i32_0 : i32, i32
  }
  func.func @transform_8(%arg0: i32, %arg1: i32) -> (i32, i32) {
    %c0_i32 = arith.constant 0 : i32
    %c0_i32_0 = arith.constant 0 : i32
    %c0_i32_1 = arith.constant 0 : i32
    return %c0_i32, %c0_i32_0 : i32, i32
  }
  func.func @transform_9(%arg0: i32, %arg1: i32) -> (i32, i32) {
    %c0_i32 = arith.constant 0 : i32
    %c0_i32_0 = arith.constant 0 : i32
    %c0_i32_1 = arith.constant 0 : i32
    return %c0_i32, %c0_i32_0 : i32, i32
  }
  func.func @transform_10(%arg0: i32, %arg1: i32) -> (i32, i32) {
    %c0_i32 = arith.constant 0 : i32
    %c0_i32_0 = arith.constant 0 : i32
    %c0_i32_1 = arith.constant 0 : i32
    return %c0_i32, %c0_i32_0 : i32, i32
  }
  func.func @transform_11(%arg0: i32, %arg1: i32) -> (i32, i32) {
    %c0_i32 = arith.constant 0 : i32
    %c0_i32_0 = arith.constant 0 : i32
    %c0_i32_1 = arith.constant 0 : i32
    return %c0_i32, %c0_i32_0 : i32, i32
  }
  func.func @transform_12(%arg0: i32, %arg1: i32) -> (i32, i32) {
    %c0_i32 = arith.constant 0 : i32
    %c0_i32_0 = arith.constant 0 : i32
    %c0_i32_1 = arith.constant 0 : i32
    return %c0_i32, %c0_i32_0 : i32, i32
  }
  func.func @transform_13(%arg0: i32, %arg1: i32) -> (i32, i32) {
    %c0_i32 = arith.constant 0 : i32
    %c0_i32_0 = arith.constant 0 : i32
    %c0_i32_1 = arith.constant 0 : i32
    return %c0_i32, %c0_i32_0 : i32, i32
  }
  func.func @transform_14(%arg0: i32, %arg1: i32) -> (i32, i32) {
    %c0_i32 = arith.constant 0 : i32
    %c0_i32_0 = arith.constant 0 : i32
    %c0_i32_1 = arith.constant 0 : i32
    return %c0_i32, %c0_i32_0 : i32, i32
  }
  func.func @transform_15(%arg0: i32, %arg1: i32) -> (i32, i32) {
    %c0_i32 = arith.constant 0 : i32
    %c0_i32_0 = arith.constant 0 : i32
    %c0_i32_1 = arith.constant 0 : i32
    return %c0_i32, %c0_i32_0 : i32, i32
  }
  func.func @transform_16(%arg0: i32, %arg1: i32) -> (i32, i32) {
    %c0_i32 = arith.constant 0 : i32
    %c0_i32_0 = arith.constant 0 : i32
    %c0_i32_1 = arith.constant 0 : i32
    return %c0_i32, %c0_i32_0 : i32, i32
  }
  func.func @transform_17(%arg0: i32, %arg1: i32) -> (i32, i32, i32) {
    %c0_i32 = arith.constant 0 : i32
    %c0_i32_0 = arith.constant 0 : i32
    return %arg0, %c0_i32, %arg1 : i32, i32, i32
  }
}

</mosaic_0001>

<llo_original>
// kernel: tpu_custom_call.1
$region0: #{tpu_custom_call.1}
  #allocation0 [shape = 'u32[]', space=smem, size = 0x4, offset = 0x4, fixed_abs, tag = 'smem constant byte address 0x4 - core index']
  #allocation1 [shape = 'u32[144,128]{1,0:T(1,128)}', space=vmem, size = 0x12000, scoped, tag = 'internal scratch']
  #allocation2 [shape = 'f32[1,1]{1,0:T(1,128)S(1)}', space=vmem, size = 0x200, scoped, tag = 'scoped memory for tpu_custom_call.1']
  %s0 = inlined_call_operand.vmem [shape: f32[2,4,256], index: 0, kind: input, shape index: {}]
  %s1 = inlined_call_operand.hbm [shape: f32[2,8,256], index: 1, kind: input, shape index: {}]
  %s2 = inlined_call_operand.vmem [shape: f32[2,16,256], index: 2, kind: input, shape index: {}]
  %s3 = inlined_call_operand.hbm [shape: f32[2,8,256], index: 3, kind: input, shape index: {}]
  %s4 = inlined_call_operand.hbm [shape: f32[2,4,256], index: 4, kind: input, shape index: {}]
  %s5 = inlined_call_operand.vmem [shape: f32[8,4], index: 5, kind: input, shape index: {}]
  %s6 = inlined_call_operand.vmem [shape: f32[8,8], index: 6, kind: input, shape index: {}]
  %s7 = inlined_call_operand.vmem [shape: f32[8,16], index: 7, kind: input, shape index: {}]
  %s8 = inlined_call_operand.hbm [shape: f32[8,8], index: 8, kind: input, shape index: {}]
  %s9 = inlined_call_operand.vmem [shape: f32[8,4], index: 9, kind: input, shape index: {}]
  %s10 = inlined_call_operand.vmem [shape: f32[8,1], index: 10, kind: input, shape index: {}]
  %s11 = inlined_call_operand.vmem [shape: f32[8,1], index: 11, kind: input, shape index: {}]
  %s12 = inlined_call_operand.vmem [shape: f32[8,1], index: 12, kind: input, shape index: {}]
  %s13 = inlined_call_operand.vmem [shape: f32[8,1], index: 13, kind: input, shape index: {}]
  %s14 = inlined_call_operand.vmem [shape: f32[8,1], index: 14, kind: input, shape index: {}]
  %s15 = inlined_call_operand.vmem [shape: f32[1,8], index: 15, kind: input, shape index: {}]
  %s16 = inlined_call_operand.<no memory space> [shape: f32[1,1], index: 16, kind: input, shape index: {}]
  %s17 = inlined_call_operand.hbm [shape: f32[2,4,256], index: 17, kind: output, shape index: {}]
  %s18 = sld [smem:[#allocation0]]
  $region117: #{tpu_custom_call.1} parent=0
    _
  %s20 = ssub.s32 1, %s18
  %s21 = scalar_select 0, %s20, %s18
  %v22 = vstv %s16
  %23 = vst [vmem:[#allocation2] sm:$0x1] %v22
  $region1: #{tpu_custom_call.1} parent=0
    #allocation3 [shape = 'u8[16384]{0}', space=vmem, size = 0x4000, scoped, tag = 'input window, operand 1']
    #allocation4 [shape = 's32[2]{0}', space=sflag, size = 0x8, scoped, tag = 'scoped memory for tpu_custom_call.1']
    #allocation5 [shape = 's32[2]{0}', space=sflag, size = 0x8, scoped, tag = 'scoped memory for tpu_custom_call.1']
    #allocation6 [shape = 'u8[16384]{0}', space=vmem, size = 0x4000, scoped, tag = 'input window, operand 3']
    #allocation7 [shape = 's32[2]{0}', space=sflag, size = 0x8, scoped, tag = 'scoped memory for tpu_custom_call.1']
    #allocation8 [shape = 'u8[8192]{0}', space=vmem, size = 0x2000, scoped, tag = 'input window, operand 4']
    #allocation9 [shape = 'u8[4096]{0}', space=vmem, size = 0x1000, scoped, tag = 'input window, operand 8, single buffered']
    #allocation10 [shape = 's32[1]{0}', space=sflag, size = 0x4, scoped, tag = 'scoped memory for tpu_custom_call.1']
    #allocation11 [shape = 'u8[8192]{0}', space=vmem, size = 0x2000, scoped, tag = 'output window, operand 0']
    %24 = vsyncpa [#allocation4], 0
    %s25 = scalar_lea.sflag [#allocation4], 1
    %26 = vsyncpa %s25, 0
    %27 = vsyncpa [#allocation7], 0
    %s28 = scalar_lea.sflag [#allocation7], 1
    %29 = vsyncpa %s28, 0
    %30 = vsyncpa [#allocation10], 0
    %31 = vsyncpa [#allocation5], 0
    %s32 = scalar_lea.sflag [#allocation5], 1
    %33 = vsyncpa %s32, 0
    loop: start=0, step=1, limit=4
    $region2: #{tpu_custom_call.1} parent=1 // loop_pre_header
      _
    $region3: #{tpu_custom_call.1} parent=1 // loop_header
      %s35 = sphi 0, %s39
      %p36 = scmp.ge.s32.totalorder %s35, 4
      %s42 = sphi 0, %s54
      %s43 = sphi 0, %s50
      %s44 = sphi 0, %s42
      %s45 = sphi 0, %s43
      %s46 = sphi 0, %s44
      %s47 = sphi 0, %s45
      %s59 = sphi 0, %s61
      %s62 = sphi 0, %s59
      %s63 = sphi 0, %s62
      %s79 = sphi 0, %s63
      %s87 = sphi 0, %s89
      %s90 = sphi 0, %s87
      %s91 = sphi 0, %s90
      %s107 = sphi 0, %s91
      %s115 = sphi 0, %s117
      %s118 = sphi 0, %s115
      %s119 = sphi 0, %s118
      %s135 = sphi 0, %s119
      %s143 = sphi 0, %s145
      %s146 = sphi 0, %s143
      %s147 = sphi 0, %s146
      %s163 = sphi 0, %s147
      %s171 = sphi 0, %s173
      %s174 = sphi 0, %s171
      %s175 = sphi 0, %s174
      %s191 = sphi 0, %s175
      %s195 = sphi 0, %s195
      %s197 = sphi 0, %s195
      %s198 = sphi 0, %s197
      %s212 = sphi 0, %s198
      %s216 = sphi 0, %s216
      %s218 = sphi 0, %s216
      %s219 = sphi 0, %s218
      %s233 = sphi 0, %s219
      %s237 = sphi 0, %s237
      %s239 = sphi 0, %s237
      %s240 = sphi 0, %s239
      %s254 = sphi 0, %s240
      %s258 = sphi 0, %s258
      %s260 = sphi 0, %s258
      %s261 = sphi 0, %s260
      %s275 = sphi 0, %s261
      %s279 = sphi 0, %s279
      %s281 = sphi 0, %s279
      %s282 = sphi 0, %s281
      %s296 = sphi 0, %s282
      %s300 = sphi 0, %s300
      %s302 = sphi 0, %s300
      %s303 = sphi 0, %s302
      %s317 = sphi 0, %s303
      %s321 = sphi 0, %s321
      %s323 = sphi 0, %s321
      %s324 = sphi 0, %s323
      %s338 = sphi 0, %s324
      %s342 = sphi 0, %s342
      %s344 = sphi 0, %s342
      %s345 = sphi 0, %s344
      %s359 = sphi 0, %s345
      %s363 = sphi 0, %s363
      %s365 = sphi 0, %s363
      %s366 = sphi 0, %s365
      %s380 = sphi 0, %s366
      %s384 = sphi 0, %s384
      %s386 = sphi 0, %s384
      %s387 = sphi 0, %s386
      %s401 = sphi 0, %s387
      %s405 = sphi 0, %s405
      %s407 = sphi 0, %s405
      %s408 = sphi 0, %s407
      %s422 = sphi 0, %s408
      %s426 = sphi 0, %s426
      %s428 = sphi 0, %s426
      %s429 = sphi 0, %s428
      %s443 = sphi 0, %s429
      %s451 = sphi 0, %s453
      %s454 = sphi 0, %s451
      %s455 = sphi 0, %s454
      %s471 = sphi 0, %s455
    $region4: #{tpu_custom_call.1} parent=1 // loop_header_branch
      %38 = sbr.rel (%p36) target = $region8
    $region5: #{tpu_custom_call.1} parent=1 // loop_body
      %s40 = ssub.s32 %s35, 1
      %s41 = ssub.s32 %s35, 2
      %s48 = sadd.s32 1, %s43
      %p49 = scmp.ge.s32.totalorder %s48, 1
      %s50 = scalar_select %p49, 0, %s48
      %s51 = sadd.s32 1, %s42
      %s52 = scalar_select %p49, %s51, %s42
      %p53 = scmp.ge.s32.totalorder %s52, 2
      %s54 = scalar_select %p53, 0, %s52
      %s55 = ssub.s32 %s42, %s54
      %s56 = ssub.s32 %s43, %s50
      %s57 = sor.u32 %s55, %s56
      %p58 = scmp.eq.s32.totalorder %s57, 0
      %s60 = sadd.s32 %s59, 1
      %s61 = scalar_select %p58, %s59, %s60
      %p64 = pneg %p58
      %p65 = scmp.eq.s32.totalorder %s35, 1
      %p66 = por %p64, %p65
      %p67 = scmp.ne.s32.totalorder %s59, %s62
      %p68 = scmp.eq.s32.totalorder %s35, 0
      %p69 = por %p67, %p68
      %p70 = scmp.ne.s32.totalorder %s59, %s62
      %p71 = scmp.eq.s32.totalorder %s40, 1
      %p72 = por %p70, %p71
      %p73 = scmp.ne.s32.totalorder %s62, %s63
      %p74 = scmp.eq.s32.totalorder %s40, 0
      %p75 = por %p73, %p74
      %p76 = scmp.ne.s32.totalorder %s62, %s63
      %p77 = scmp.eq.s32.totalorder %s41, 1
      %p78 = por %p76, %p77
      %p80 = scmp.ne.s32.totalorder %s63, %s79
      %p81 = scmp.eq.s32.totalorder %s41, 0
      %p82 = por %p80, %p81
      %s83 = ssub.s32 %s42, %s54
      %s84 = ssub.s32 %s43, %s50
      %s85 = sor.u32 %s83, %s84
      %p86 = scmp.eq.s32.totalorder %s85, 0
      %s88 = sadd.s32 %s87, 1
      %s89 = scalar_select %p86, %s87, %s88
      %p92 = pneg %p86
      %p93 = scmp.eq.s32.totalorder %s35, 1
      %p94 = por %p92, %p93
      %p95 = scmp.ne.s32.totalorder %s87, %s90
      %p96 = scmp.eq.s32.totalorder %s35, 0
      %p97 = por %p95, %p96
      %p98 = scmp.ne.s32.totalorder %s87, %s90
      %p99 = scmp.eq.s32.totalorder %s40, 1
      %p100 = por %p98, %p99
      %p101 = scmp.ne.s32.totalorder %s90, %s91
      %p102 = scmp.eq.s32.totalorder %s40, 0
      %p103 = por %p101, %p102
      %p104 = scmp.ne.s32.totalorder %s90, %s91
      %p105 = scmp.eq.s32.totalorder %s41, 1
      %p106 = por %p104, %p105
      %p108 = scmp.ne.s32.totalorder %s91, %s107
      %p109 = scmp.eq.s32.totalorder %s41, 0
      %p110 = por %p108, %p109
      %s111 = ssub.s32 %s42, %s54
      %s112 = ssub.s32 %s43, %s50
      %s113 = sor.u32 %s111, %s112
      %p114 = scmp.eq.s32.totalorder %s113, 0
      %s116 = sadd.s32 %s115, 1
      %s117 = scalar_select %p114, %s115, %s116
      %p120 = pneg %p114
      %p121 = scmp.eq.s32.totalorder %s35, 1
      %p122 = por %p120, %p121
      %p123 = scmp.ne.s32.totalorder %s115, %s118
      %p124 = scmp.eq.s32.totalorder %s35, 0
      %p125 = por %p123, %p124
      %p126 = scmp.ne.s32.totalorder %s115, %s118
      %p127 = scmp.eq.s32.totalorder %s40, 1
      %p128 = por %p126, %p127
      %p129 = scmp.ne.s32.totalorder %s118, %s119
      %p130 = scmp.eq.s32.totalorder %s40, 0
      %p131 = por %p129, %p130
      %p132 = scmp.ne.s32.totalorder %s118, %s119
      %p133 = scmp.eq.s32.totalorder %s41, 1
      %p134 = por %p132, %p133
      %p136 = scmp.ne.s32.totalorder %s119, %s135
      %p137 = scmp.eq.s32.totalorder %s41, 0
      %p138 = por %p136, %p137
      %s139 = ssub.s32 %s42, %s54
      %s140 = ssub.s32 %s43, %s50
      %s141 = sor.u32 %s139, %s140
      %p142 = scmp.eq.s32.totalorder %s141, 0
      %s144 = sadd.s32 %s143, 1
      %s145 = scalar_select %p142, %s143, %s144
      %p148 = pneg %p142
      %p149 = scmp.eq.s32.totalorder %s35, 1
      %p150 = por %p148, %p149
      %p151 = scmp.ne.s32.totalorder %s143, %s146
      %p152 = scmp.eq.s32.totalorder %s35, 0
      %p153 = por %p151, %p152
      %p154 = scmp.ne.s32.totalorder %s143, %s146
      %p155 = scmp.eq.s32.totalorder %s40, 1
      %p156 = por %p154, %p155
      %p157 = scmp.ne.s32.totalorder %s146, %s147
      %p158 = scmp.eq.s32.totalorder %s40, 0
      %p159 = por %p157, %p158
      %p160 = scmp.ne.s32.totalorder %s146, %s147
      %p161 = scmp.eq.s32.totalorder %s41, 1
      %p162 = por %p160, %p161
      %p164 = scmp.ne.s32.totalorder %s147, %s163
      %p165 = scmp.eq.s32.totalorder %s41, 0
      %p166 = por %p164, %p165
      %s167 = ssub.s32 %s42, %s54
      %s168 = ssub.s32 %s43, %s50
      %s169 = sor.u32 %s167, %s168
      %p170 = scmp.eq.s32.totalorder %s169, 0
      %s172 = sadd.s32 %s171, 1
      %s173 = scalar_select %p170, %s171, %s172
      %p176 = pneg %p170
      %p177 = scmp.eq.s32.totalorder %s35, 1
      %p178 = por %p176, %p177
      %p179 = scmp.ne.s32.totalorder %s171, %s174
      %p180 = scmp.eq.s32.totalorder %s35, 0
      %p181 = por %p179, %p180
      %p182 = scmp.ne.s32.totalorder %s171, %s174
      %p183 = scmp.eq.s32.totalorder %s40, 1
      %p184 = por %p182, %p183
      %p185 = scmp.ne.s32.totalorder %s174, %s175
      %p186 = scmp.eq.s32.totalorder %s40, 0
      %p187 = por %p185, %p186
      %p188 = scmp.ne.s32.totalorder %s174, %s175
      %p189 = scmp.eq.s32.totalorder %s41, 1
      %p190 = por %p188, %p189
      %p192 = scmp.ne.s32.totalorder %s175, %s191
      %p193 = scmp.eq.s32.totalorder %s41, 0
      %p194 = por %p192, %p193
      %s196 = sadd.s32 %s195, 1
      %p199 = scmp.eq.s32.totalorder %s35, 1
      %p200 = scmp.ne.s32.totalorder %s195, %s197
      %p201 = scmp.eq.s32.totalorder %s35, 0
      %p202 = por %p200, %p201
      %p203 = scmp.ne.s32.totalorder %s195, %s197
      %p204 = scmp.eq.s32.totalorder %s40, 1
      %p205 = por %p203, %p204
      %p206 = scmp.ne.s32.totalorder %s197, %s198
      %p207 = scmp.eq.s32.totalorder %s40, 0
      %p208 = por %p206, %p207
      %p209 = scmp.ne.s32.totalorder %s197, %s198
      %p210 = scmp.eq.s32.totalorder %s41, 1
      %p211 = por %p209, %p210
      %p213 = scmp.ne.s32.totalorder %s198, %s212
      %p214 = scmp.eq.s32.totalorder %s41, 0
      %p215 = por %p213, %p214
      %s217 = sadd.s32 %s216, 1
      %p220 = scmp.eq.s32.totalorder %s35, 1
      %p221 = scmp.ne.s32.totalorder %s216, %s218
      %p222 = scmp.eq.s32.totalorder %s35, 0
      %p223 = por %p221, %p222
      %p224 = scmp.ne.s32.totalorder %s216, %s218
      %p225 = scmp.eq.s32.totalorder %s40, 1
      %p226 = por %p224, %p225
      %p227 = scmp.ne.s32.totalorder %s218, %s219
      %p228 = scmp.eq.s32.totalorder %s40, 0
      %p229 = por %p227, %p228
      %p230 = scmp.ne.s32.totalorder %s218, %s219
      %p231 = scmp.eq.s32.totalorder %s41, 1
      %p232 = por %p230, %p231
      %p234 = scmp.ne.s32.totalorder %s219, %s233
      %p235 = scmp.eq.s32.totalorder %s41, 0
      %p236 = por %p234, %p235
      %s238 = sadd.s32 %s237, 1
      %p241 = scmp.eq.s32.totalorder %s35, 1
      %p242 = scmp.ne.s32.totalorder %s237, %s239
      %p243 = scmp.eq.s32.totalorder %s35, 0
      %p244 = por %p242, %p243
      %p245 = scmp.ne.s32.totalorder %s237, %s239
      %p246 = scmp.eq.s32.totalorder %s40, 1
      %p247 = por %p245, %p246
      %p248 = scmp.ne.s32.totalorder %s239, %s240
      %p249 = scmp.eq.s32.totalorder %s40, 0
      %p250 = por %p248, %p249
      %p251 = scmp.ne.s32.totalorder %s239, %s240
      %p252 = scmp.eq.s32.totalorder %s41, 1
      %p253 = por %p251, %p252
      %p255 = scmp.ne.s32.totalorder %s240, %s254
      %p256 = scmp.eq.s32.totalorder %s41, 0
      %p257 = por %p255, %p256
      %s259 = sadd.s32 %s258, 1
      %p262 = scmp.eq.s32.totalorder %s35, 1
      %p263 = scmp.ne.s32.totalorder %s258, %s260
      %p264 = scmp.eq.s32.totalorder %s35, 0
      %p265 = por %p263, %p264
      %p266 = scmp.ne.s32.totalorder %s258, %s260
      %p267 = scmp.eq.s32.totalorder %s40, 1
      %p268 = por %p266, %p267
      %p269 = scmp.ne.s32.totalorder %s260, %s261
      %p270 = scmp.eq.s32.totalorder %s40, 0
      %p271 = por %p269, %p270
      %p272 = scmp.ne.s32.totalorder %s260, %s261
      %p273 = scmp.eq.s32.totalorder %s41, 1
      %p274 = por %p272, %p273
      %p276 = scmp.ne.s32.totalorder %s261, %s275
      %p277 = scmp.eq.s32.totalorder %s41, 0
      %p278 = por %p276, %p277
      %s280 = sadd.s32 %s279, 1
      %p283 = scmp.eq.s32.totalorder %s35, 1
      %p284 = scmp.ne.s32.totalorder %s279, %s281
      %p285 = scmp.eq.s32.totalorder %s35, 0
      %p286 = por %p284, %p285
      %p287 = scmp.ne.s32.totalorder %s279, %s281
      %p288 = scmp.eq.s32.totalorder %s40, 1
      %p289 = por %p287, %p288
      %p290 = scmp.ne.s32.totalorder %s281, %s282
      %p291 = scmp.eq.s32.totalorder %s40, 0
      %p292 = por %p290, %p291
      %p293 = scmp.ne.s32.totalorder %s281, %s282
      %p294 = scmp.eq.s32.totalorder %s41, 1
      %p295 = por %p293, %p294
      %p297 = scmp.ne.s32.totalorder %s282, %s296
      %p298 = scmp.eq.s32.totalorder %s41, 0
      %p299 = por %p297, %p298
      %s301 = sadd.s32 %s300, 1
      %p304 = scmp.eq.s32.totalorder %s35, 1
      %p305 = scmp.ne.s32.totalorder %s300, %s302
      %p306 = scmp.eq.s32.totalorder %s35, 0
      %p307 = por %p305, %p306
      %p308 = scmp.ne.s32.totalorder %s300, %s302
      %p309 = scmp.eq.s32.totalorder %s40, 1
      %p310 = por %p308, %p309
      %p311 = scmp.ne.s32.totalorder %s302, %s303
      %p312 = scmp.eq.s32.totalorder %s40, 0
      %p313 = por %p311, %p312
      %p314 = scmp.ne.s32.totalorder %s302, %s303
      %p315 = scmp.eq.s32.totalorder %s41, 1
      %p316 = por %p314, %p315
      %p318 = scmp.ne.s32.totalorder %s303, %s317
      %p319 = scmp.eq.s32.totalorder %s41, 0
      %p320 = por %p318, %p319
      %s322 = sadd.s32 %s321, 1
      %p325 = scmp.eq.s32.totalorder %s35, 1
      %p326 = scmp.ne.s32.totalorder %s321, %s323
      %p327 = scmp.eq.s32.totalorder %s35, 0
      %p328 = por %p326, %p327
      %p329 = scmp.ne.s32.totalorder %s321, %s323
      %p330 = scmp.eq.s32.totalorder %s40, 1
      %p331 = por %p329, %p330
      %p332 = scmp.ne.s32.totalorder %s323, %s324
      %p333 = scmp.eq.s32.totalorder %s40, 0
      %p334 = por %p332, %p333
      %p335 = scmp.ne.s32.totalorder %s323, %s324
      %p336 = scmp.eq.s32.totalorder %s41, 1
      %p337 = por %p335, %p336
      %p339 = scmp.ne.s32.totalorder %s324, %s338
      %p340 = scmp.eq.s32.totalorder %s41, 0
      %p341 = por %p339, %p340
      %s343 = sadd.s32 %s342, 1
      %p346 = scmp.eq.s32.totalorder %s35, 1
      %p347 = scmp.ne.s32.totalorder %s342, %s344
      %p348 = scmp.eq.s32.totalorder %s35, 0
      %p349 = por %p347, %p348
      %p350 = scmp.ne.s32.totalorder %s342, %s344
      %p351 = scmp.eq.s32.totalorder %s40, 1
      %p352 = por %p350, %p351
      %p353 = scmp.ne.s32.totalorder %s344, %s345
      %p354 = scmp.eq.s32.totalorder %s40, 0
      %p355 = por %p353, %p354
      %p356 = scmp.ne.s32.totalorder %s344, %s345
      %p357 = scmp.eq.s32.totalorder %s41, 1
      %p358 = por %p356, %p357
      %p360 = scmp.ne.s32.totalorder %s345, %s359
      %p361 = scmp.eq.s32.totalorder %s41, 0
      %p362 = por %p360, %p361
      %s364 = sadd.s32 %s363, 1
      %p367 = scmp.eq.s32.totalorder %s35, 1
      %p368 = scmp.ne.s32.totalorder %s363, %s365
      %p369 = scmp.eq.s32.totalorder %s35, 0
      %p370 = por %p368, %p369
      %p371 = scmp.ne.s32.totalorder %s363, %s365
      %p372 = scmp.eq.s32.totalorder %s40, 1
      %p373 = por %p371, %p372
      %p374 = scmp.ne.s32.totalorder %s365, %s366
      %p375 = scmp.eq.s32.totalorder %s40, 0
      %p376 = por %p374, %p375
      %p377 = scmp.ne.s32.totalorder %s365, %s366
      %p378 = scmp.eq.s32.totalorder %s41, 1
      %p379 = por %p377, %p378
      %p381 = scmp.ne.s32.totalorder %s366, %s380
      %p382 = scmp.eq.s32.totalorder %s41, 0
      %p383 = por %p381, %p382
      %s385 = sadd.s32 %s384, 1
      %p388 = scmp.eq.s32.totalorder %s35, 1
      %p389 = scmp.ne.s32.totalorder %s384, %s386
      %p390 = scmp.eq.s32.totalorder %s35, 0
      %p391 = por %p389, %p390
      %p392 = scmp.ne.s32.totalorder %s384, %s386
      %p393 = scmp.eq.s32.totalorder %s40, 1
      %p394 = por %p392, %p393
      %p395 = scmp.ne.s32.totalorder %s386, %s387
      %p396 = scmp.eq.s32.totalorder %s40, 0
      %p397 = por %p395, %p396
      %p398 = scmp.ne.s32.totalorder %s386, %s387
      %p399 = scmp.eq.s32.totalorder %s41, 1
      %p400 = por %p398, %p399
      %p402 = scmp.ne.s32.totalorder %s387, %s401
      %p403 = scmp.eq.s32.totalorder %s41, 0
      %p404 = por %p402, %p403
      %s406 = sadd.s32 %s405, 1
      %p409 = scmp.eq.s32.totalorder %s35, 1
      %p410 = scmp.ne.s32.totalorder %s405, %s407
      %p411 = scmp.eq.s32.totalorder %s35, 0
      %p412 = por %p410, %p411
      %p413 = scmp.ne.s32.totalorder %s405, %s407
      %p414 = scmp.eq.s32.totalorder %s40, 1
      %p415 = por %p413, %p414
      %p416 = scmp.ne.s32.totalorder %s407, %s408
      %p417 = scmp.eq.s32.totalorder %s40, 0
      %p418 = por %p416, %p417
      %p419 = scmp.ne.s32.totalorder %s407, %s408
      %p420 = scmp.eq.s32.totalorder %s41, 1
      %p421 = por %p419, %p420
      %p423 = scmp.ne.s32.totalorder %s408, %s422
      %p424 = scmp.eq.s32.totalorder %s41, 0
      %p425 = por %p423, %p424
      %s427 = sadd.s32 %s426, 1
      %p430 = scmp.eq.s32.totalorder %s35, 1
      %p431 = scmp.ne.s32.totalorder %s426, %s428
      %p432 = scmp.eq.s32.totalorder %s35, 0
      %p433 = por %p431, %p432
      %p434 = scmp.ne.s32.totalorder %s426, %s428
      %p435 = scmp.eq.s32.totalorder %s40, 1
      %p436 = por %p434, %p435
      %p437 = scmp.ne.s32.totalorder %s428, %s429
      %p438 = scmp.eq.s32.totalorder %s40, 0
      %p439 = por %p437, %p438
      %p440 = scmp.ne.s32.totalorder %s428, %s429
      %p441 = scmp.eq.s32.totalorder %s41, 1
      %p442 = por %p440, %p441
      %p444 = scmp.ne.s32.totalorder %s429, %s443
      %p445 = scmp.eq.s32.totalorder %s41, 0
      %p446 = por %p444, %p445
      %s447 = ssub.s32 %s42, %s54
      %s448 = ssub.s32 %s43, %s50
      %s449 = sor.u32 %s447, %s448
      %p450 = scmp.eq.s32.totalorder %s449, 0
      %s452 = sadd.s32 %s451, 1
      %s453 = scalar_select %p450, %s451, %s452
      %p456 = pneg %p450
      %p457 = scmp.eq.s32.totalorder %s35, 1
      %p458 = por %p456, %p457
      %p459 = scmp.ne.s32.totalorder %s451, %s454
      %p460 = scmp.eq.s32.totalorder %s35, 0
      %p461 = por %p459, %p460
      %p462 = scmp.ne.s32.totalorder %s451, %s454
      %p463 = scmp.eq.s32.totalorder %s40, 1
      %p464 = por %p462, %p463
      %p465 = scmp.ne.s32.totalorder %s454, %s455
      %p466 = scmp.eq.s32.totalorder %s40, 0
      %p467 = por %p465, %p466
      %p468 = scmp.ne.s32.totalorder %s454, %s455
      %p469 = scmp.eq.s32.totalorder %s41, 1
      %p470 = por %p468, %p469
      %p472 = scmp.ne.s32.totalorder %s455, %s471
      %p473 = scmp.eq.s32.totalorder %s41, 0
      %p474 = por %p472, %p473
      %p475 = scmp.le.s32.totalorder 1, %s35
      %p476 = scmp.lt.s32.totalorder %s35, 3
      %p477 = pnand %p475, %p476
      %p478 = pneg %p477
      // Predicated region
      $region9: #{tpu_custom_call.1} parent=5 // pred_check
        _
      $region10: #{tpu_custom_call.1} parent=5 // pred_check_branch
        %480 = sbr.rel (%p477) target = $region12
      $region11: #{tpu_custom_call.1} parent=5 // pred_region
        %s481 = ssub.s32 %s35, 1
        // Predicated region
        $region13: #{tpu_custom_call.1} parent=11 // pred_check
          %p482 = pneg %p208
        $region14: #{tpu_custom_call.1} parent=11 // pred_check_branch
          %484 = sbr.rel (%p482) target = $region16
        $region15: #{tpu_custom_call.1} parent=11 // pred_region
          _
        $region16: #{tpu_custom_call.1} parent=11 // pred_fallthru
          _
        // Predicated region
        $region17: #{tpu_custom_call.1} parent=11 // pred_check
          %p485 = pneg %p229
        $region18: #{tpu_custom_call.1} parent=11 // pred_check_branch
          %487 = sbr.rel (%p485) target = $region20
        $region19: #{tpu_custom_call.1} parent=11 // pred_region
          _
        $region20: #{tpu_custom_call.1} parent=11 // pred_fallthru
          _
        // Predicated region
        $region21: #{tpu_custom_call.1} parent=11 // pred_check
          %p488 = pneg %p250
        $region22: #{tpu_custom_call.1} parent=11 // pred_check_branch
          %490 = sbr.rel (%p488) target = $region24
        $region23: #{tpu_custom_call.1} parent=11 // pred_region
          _
        $region24: #{tpu_custom_call.1} parent=11 // pred_fallthru
          _
        // Predicated region
        $region25: #{tpu_custom_call.1} parent=11 // pred_check
          %p491 = pneg %p271
        $region26: #{tpu_custom_call.1} parent=11 // pred_check_branch
          %493 = sbr.rel (%p491) target = $region28
        $region27: #{tpu_custom_call.1} parent=11 // pred_region
          %s495 = ssub.s32 128, 128
          %496 = vsyncadd [#allocation10], %s495
          %s498 = sshll.u32 [#allocation9], 4
          %s499 = int_to_ptr.vmem [resolvable:$true] %s498
          %501 = dma.hbm_to_vmem [thread:$0]  %s8, 128, %s499, [#allocation10]
        $region28: #{tpu_custom_call.1} parent=11 // pred_fallthru
          _
        // Predicated region
        $region29: #{tpu_custom_call.1} parent=11 // pred_check
          %p502 = pneg %p292
        $region30: #{tpu_custom_call.1} parent=11 // pred_check_branch
          %504 = sbr.rel (%p502) target = $region32
        $region31: #{tpu_custom_call.1} parent=11 // pred_region
          _
        $region32: #{tpu_custom_call.1} parent=11 // pred_fallthru
          _
        // Predicated region
        $region33: #{tpu_custom_call.1} parent=11 // pred_check
          %p505 = pneg %p313
        $region34: #{tpu_custom_call.1} parent=11 // pred_check_branch
          %507 = sbr.rel (%p505) target = $region36
        $region35: #{tpu_custom_call.1} parent=11 // pred_region
          _
        $region36: #{tpu_custom_call.1} parent=11 // pred_fallthru
          _
        // Predicated region
        $region37: #{tpu_custom_call.1} parent=11 // pred_check
          %p508 = pneg %p334
        $region38: #{tpu_custom_call.1} parent=11 // pred_check_branch
          %510 = sbr.rel (%p508) target = $region40
        $region39: #{tpu_custom_call.1} parent=11 // pred_region
          _
        $region40: #{tpu_custom_call.1} parent=11 // pred_fallthru
          _
        // Predicated region
        $region41: #{tpu_custom_call.1} parent=11 // pred_check
          %p511 = pneg %p355
        $region42: #{tpu_custom_call.1} parent=11 // pred_check_branch
          %513 = sbr.rel (%p511) target = $region44
        $region43: #{tpu_custom_call.1} parent=11 // pred_region
          _
        $region44: #{tpu_custom_call.1} parent=11 // pred_fallthru
          _
        // Predicated region
        $region45: #{tpu_custom_call.1} parent=11 // pred_check
          %p514 = pneg %p376
        $region46: #{tpu_custom_call.1} parent=11 // pred_check_branch
          %516 = sbr.rel (%p514) target = $region48
        $region47: #{tpu_custom_call.1} parent=11 // pred_region
          _
        $region48: #{tpu_custom_call.1} parent=11 // pred_fallthru
          _
        // Predicated region
        $region49: #{tpu_custom_call.1} parent=11 // pred_check
          %p517 = pneg %p397
        $region50: #{tpu_custom_call.1} parent=11 // pred_check_branch
          %519 = sbr.rel (%p517) target = $region52
        $region51: #{tpu_custom_call.1} parent=11 // pred_region
          _
        $region52: #{tpu_custom_call.1} parent=11 // pred_fallthru
          _
        // Predicated region
        $region53: #{tpu_custom_call.1} parent=11 // pred_check
          %p520 = pneg %p418
        $region54: #{tpu_custom_call.1} parent=11 // pred_check_branch
          %522 = sbr.rel (%p520) target = $region56
        $region55: #{tpu_custom_call.1} parent=11 // pred_region
          _
        $region56: #{tpu_custom_call.1} parent=11 // pred_fallthru
          _
        // Predicated region
        $region57: #{tpu_custom_call.1} parent=11 // pred_check
          %p523 = pneg %p439
        $region58: #{tpu_custom_call.1} parent=11 // pred_check_branch
          %525 = sbr.rel (%p523) target = $region60
        $region59: #{tpu_custom_call.1} parent=11 // pred_region
          _
        $region60: #{tpu_custom_call.1} parent=11 // pred_fallthru
          _
      $region12: #{tpu_custom_call.1} parent=5 // pred_fallthru
        _
      %p526 = scmp.lt.s32.totalorder %s35, 2
      // Predicated region
      $region61: #{tpu_custom_call.1} parent=5 // pred_check
        %p527 = pneg %p526
      $region62: #{tpu_custom_call.1} parent=5 // pred_check_branch
        %529 = sbr.rel (%p527) target = $region64
      $region63: #{tpu_custom_call.1} parent=5 // pred_region
        // Predicated region
        $region65: #{tpu_custom_call.1} parent=63 // pred_check
          %p530 = pneg %p69
        $region66: #{tpu_custom_call.1} parent=63 // pred_check_branch
          %532 = sbr.rel (%p530) target = $region68
        $region67: #{tpu_custom_call.1} parent=63 // pred_region
          %s533 = smul.u32 2, %s43
          %p534 = scmp.lt.s32.totalorder %s42, 1
          %s535 = scalar_select %p534, %s42, 1
          %p536 = scmp.lt.s32.totalorder %s533, 1
          %s537 = scalar_select %p536, %s533, 1
          %s538 = smul.addr %s535, 2
          %s539 = sadd.s32 %s537, %s538
          %s540 = smul.addr %s539, 4
          %s541 = scalar_lea.vmem %s0, %s540
          %s542 = smul.u32 2, %s43
        $region68: #{tpu_custom_call.1} parent=63 // pred_fallthru
          _
        // Predicated region
        $region69: #{tpu_custom_call.1} parent=63 // pred_check
          %p543 = pneg %p97
        $region70: #{tpu_custom_call.1} parent=63 // pred_check_branch
          %545 = sbr.rel (%p543) target = $region72
        $region71: #{tpu_custom_call.1} parent=63 // pred_region
          %s546 = sand.u32 %s87, 1
          %s547 = scalar_lea.sflag [#allocation4], %s546
          %s548 = sand.u32 %s87, 1
          %s549 = smul.addr %s548, 16
          %s550 = scalar_lea.vmem [#allocation3], %s549
          %s551 = smul.u32 2, %s43
          %s553 = ssub.s32 256, 256
          %554 = vsyncadd %s547, %s553
          %s555 = smul.addr %s42, 2
          %s556 = sadd.s32 %s551, %s555
          %s557 = smul.addr %s556, 128
          %s558 = scalar_lea.hbm %s1, %s557
          %s560 = sshll.u32 %s550, 4
          %s561 = int_to_ptr.vmem [resolvable:$true] %s560
          %563 = dma.hbm_to_vmem [thread:$0]  %s558, 256, %s561, %s547
        $region72: #{tpu_custom_call.1} parent=63 // pred_fallthru
          _
        // Predicated region
        $region73: #{tpu_custom_call.1} parent=63 // pred_check
          %p564 = pneg %p125
        $region74: #{tpu_custom_call.1} parent=63 // pred_check_branch
          %566 = sbr.rel (%p564) target = $region76
        $region75: #{tpu_custom_call.1} parent=63 // pred_region
          %s567 = smul.u32 2, %s43
          %p568 = scmp.lt.s32.totalorder %s42, 1
          %s569 = scalar_select %p568, %s42, 1
          %p570 = scmp.lt.s32.totalorder %s567, 1
          %s571 = scalar_select %p570, %s567, 1
          %s572 = smul.addr %s569, 4
          %s573 = sadd.s32 %s571, %s572
          %s574 = smul.addr %s573, 8
          %s575 = scalar_lea.vmem %s2, %s574
          %s576 = smul.u32 2, %s43
        $region76: #{tpu_custom_call.1} parent=63 // pred_fallthru
          _
        // Predicated region
        $region77: #{tpu_custom_call.1} parent=63 // pred_check
          %p577 = pneg %p153
        $region78: #{tpu_custom_call.1} parent=63 // pred_check_branch
          %579 = sbr.rel (%p577) target = $region80
        $region79: #{tpu_custom_call.1} parent=63 // pred_region
          %s580 = sand.u32 %s35, 1
          %s581 = scalar_lea.sflag [#allocation7], %s580
          %s582 = sand.u32 %s143, 1
          %s583 = smul.addr %s582, 16
          %s584 = scalar_lea.vmem [#allocation6], %s583
          %s585 = smul.u32 2, %s43
          %s587 = ssub.s32 256, 256
          %588 = vsyncadd %s581, %s587
          %s589 = smul.addr %s42, 2
          %s590 = sadd.s32 %s585, %s589
          %s591 = smul.addr %s590, 128
          %s592 = scalar_lea.hbm %s3, %s591
          %s594 = sshll.u32 %s584, 4
          %s595 = int_to_ptr.vmem [resolvable:$true] %s594
          %597 = dma.hbm_to_vmem [thread:$0]  %s592, 256, %s595, %s581
        $region80: #{tpu_custom_call.1} parent=63 // pred_fallthru
          _
        // Predicated region
        $region81: #{tpu_custom_call.1} parent=63 // pred_check
          %p598 = pneg %p181
        $region82: #{tpu_custom_call.1} parent=63 // pred_check_branch
          %600 = sbr.rel (%p598) target = $region84
        $region83: #{tpu_custom_call.1} parent=63 // pred_region
          %s601 = sand.u32 %s35, 1
          %s602 = scalar_lea.sflag [#allocation7], %s601
          %s603 = sand.u32 %s171, 1
          %s604 = smul.addr %s603, 8
          %s605 = scalar_lea.vmem [#allocation8], %s604
          %s606 = smul.u32 2, %s43
          %s608 = ssub.s32 128, 128
          %609 = vsyncadd %s602, %s608
          %s610 = smul.addr %s42, 2
          %s611 = sadd.s32 %s606, %s610
          %s612 = smul.addr %s611, 64
          %s613 = scalar_lea.hbm %s4, %s612
          %s615 = sshll.u32 %s605, 4
          %s616 = int_to_ptr.vmem [resolvable:$true] %s615
          %618 = dma.hbm_to_vmem [thread:$0]  %s613, 128, %s616, %s602
        $region84: #{tpu_custom_call.1} parent=63 // pred_fallthru
          _
      $region64: #{tpu_custom_call.1} parent=5 // pred_fallthru
        _
      %p619 = scmp.le.s32.totalorder 1, %s35
      %p620 = scmp.lt.s32.totalorder %s35, 3
      %p621 = pnand %p619, %p620
      %p622 = pneg %p621
      // Predicated region
      $region85: #{tpu_custom_call.1} parent=5 // pred_check
        _
      $region86: #{tpu_custom_call.1} parent=5 // pred_check_branch
        %624 = sbr.rel (%p621) target = $region88
      $region87: #{tpu_custom_call.1} parent=5 // pred_region
        %s625 = ssub.s32 %s35, 1
        %s626 = sand.u32 %s90, 1
        %s627 = scalar_lea.sflag [#allocation4], %s626
        %s628 = sand.u32 %s90, 1
        %s629 = smul.addr %s628, 16
        %s630 = scalar_lea.vmem [#allocation3], %s629
        // Predicated region
        $region89: #{tpu_custom_call.1} parent=87 // pred_check
          %p631 = pneg %p103
        $region90: #{tpu_custom_call.1} parent=87 // pred_check_branch
          %633 = sbr.rel (%p631) target = $region92
        $region91: #{tpu_custom_call.1} parent=87 // pred_region
          %634 = dma.done %s627, 256
        $region92: #{tpu_custom_call.1} parent=87 // pred_fallthru
          _
        %s635 = sand.u32 %s40, 1
        %s636 = scalar_lea.sflag [#allocation7], %s635
        %s637 = sand.u32 %s146, 1
        %s638 = smul.addr %s637, 16
        %s639 = scalar_lea.vmem [#allocation6], %s638
        // Predicated region
        $region93: #{tpu_custom_call.1} parent=87 // pred_check
          %p640 = pneg %p159
        $region94: #{tpu_custom_call.1} parent=87 // pred_check_branch
          %642 = sbr.rel (%p640) target = $region96
        $region95: #{tpu_custom_call.1} parent=87 // pred_region
          %643 = dma.done %s636, 256
        $region96: #{tpu_custom_call.1} parent=87 // pred_fallthru
          _
        %s644 = sand.u32 %s40, 1
        %s645 = scalar_lea.sflag [#allocation7], %s644
        %s646 = sand.u32 %s174, 1
        %s647 = smul.addr %s646, 8
        %s648 = scalar_lea.vmem [#allocation8], %s647
        // Predicated region
        $region97: #{tpu_custom_call.1} parent=87 // pred_check
          %p649 = pneg %p187
        $region98: #{tpu_custom_call.1} parent=87 // pred_check_branch
          %651 = sbr.rel (%p649) target = $region100
        $region99: #{tpu_custom_call.1} parent=87 // pred_region
          %652 = dma.done %s645, 128
        $region100: #{tpu_custom_call.1} parent=87 // pred_fallthru
          _
        // Predicated region
        $region101: #{tpu_custom_call.1} parent=87 // pred_check
          %p653 = pneg %p271
        $region102: #{tpu_custom_call.1} parent=87 // pred_check_branch
          %655 = sbr.rel (%p653) target = $region104
        $region103: #{tpu_custom_call.1} parent=87 // pred_region
          %656 = dma.done [#allocation10], 128
        $region104: #{tpu_custom_call.1} parent=87 // pred_fallthru
          _
        %s657 = smul.u32 2, %s45
        %p658 = scmp.lt.s32.totalorder %s44, 1
        %s659 = scalar_select %p658, %s44, 1
        %p660 = scmp.lt.s32.totalorder %s657, 1
        %s661 = scalar_select %p660, %s657, 1
        %s662 = smul.addr %s659, 2
        %s663 = sadd.s32 %s661, %s662
        %s664 = smul.addr %s663, 4
        %s665 = scalar_lea.vmem %s0, %s664
        %p666 = pneg %p75
        %p667 = pneg %p72
        %s668 = sand.u32 %s90, 1
        %s669 = scalar_lea.sflag [#allocation4], %s668
        %s670 = sand.u32 %s90, 1
        %s671 = smul.addr %s670, 16
        %s672 = scalar_lea.vmem [#allocation3], %s671
        %p673 = pneg %p103
        %p674 = pneg %p100
        %s675 = smul.u32 2, %s45
        %p676 = scmp.lt.s32.totalorder %s44, 1
        %s677 = scalar_select %p676, %s44, 1
        %p678 = scmp.lt.s32.totalorder %s675, 1
        %s679 = scalar_select %p678, %s675, 1
        %s680 = smul.addr %s677, 4
        %s681 = sadd.s32 %s679, %s680
        %s682 = smul.addr %s681, 8
        %s683 = scalar_lea.vmem %s2, %s682
        %p684 = pneg %p131
        %p685 = pneg %p128
        %s686 = sand.u32 %s40, 1
        %s687 = scalar_lea.sflag [#allocation7], %s686
        %s688 = sand.u32 %s146, 1
        %s689 = smul.addr %s688, 16
        %s690 = scalar_lea.vmem [#allocation6], %s689
        %p691 = pneg %p159
        %p692 = pneg %p156
        %s693 = sand.u32 %s40, 1
        %s694 = scalar_lea.sflag [#allocation7], %s693
        %s695 = sand.u32 %s174, 1
        %s696 = smul.addr %s695, 8
        %s697 = scalar_lea.vmem [#allocation8], %s696
        %p698 = pneg %p187
        %p699 = pneg %p184
        %p700 = pneg %p208
        %p701 = pneg %p205
        %p702 = pneg %p229
        %p703 = pneg %p226
        %p704 = pneg %p250
        %p705 = pneg %p247
        %p706 = pneg %p271
        %p707 = pneg %p268
        %p708 = pneg %p292
        %p709 = pneg %p289
        %p710 = pneg %p313
        %p711 = pneg %p310
        %p712 = pneg %p334
        %p713 = pneg %p331
        %p714 = pneg %p355
        %p715 = pneg %p352
        %p716 = pneg %p376
        %p717 = pneg %p373
        %p718 = pneg %p397
        %p719 = pneg %p394
        %p720 = pneg %p418
        %p721 = pneg %p415
        %p722 = pneg %p439
        %p723 = pneg %p436
        %p724 = pneg %p467
        %p725 = pneg %p464
        %s726 = sand.u32 %s454, 1
        %s727 = scalar_lea.sflag [#allocation5], %s726
        %s728 = sand.u32 %s454, 1
        %s729 = smul.addr %s728, 8
        %s730 = scalar_lea.vmem [#allocation11], %s729
        %s731 = smul.u32 2, %s45
        %p732 = scmp.lt.s32.totalorder %s44, 1
        %s733 = scalar_select %p732, %s44, 1
        %p734 = scmp.lt.s32.totalorder %s731, 1
        %s735 = scalar_select %p734, %s731, 1
        %s736 = smul.addr %s733, 2
        %s737 = sadd.s32 %s735, %s736
        %s738 = smul.addr %s737, 4
        %s739 = scalar_lea.vmem %s0, %s738
        %s740 = smul.u32 2, %s45
        %s741 = smul.u32 2, %s45
        %s742 = smul.u32 2, %s45
        %p743 = scmp.lt.s32.totalorder %s44, 1
        %s744 = scalar_select %p743, %s44, 1
        %p745 = scmp.lt.s32.totalorder %s742, 1
        %s746 = scalar_select %p745, %s742, 1
        %s747 = smul.addr %s744, 4
        %s748 = sadd.s32 %s746, %s747
        %s749 = smul.addr %s748, 8
        %s750 = scalar_lea.vmem %s2, %s749
        %s751 = smul.u32 2, %s45
        %s752 = smul.u32 2, %s45
        %s753 = smul.u32 2, %s45
        %s754 = smul.u32 2, %s45
        %v755 = vld [vmem:[%s5] sm:$0xff]
        %v756 = vld [vmem:[%s739] sm:$0xff]
        %v757 = vld [vmem:[%s10] sm:$0xff]
        %759 = vset.pattern.permute.xlu0 0
        %760 = vperm.xlu0 %759, %v757
        %v761 = vpop.permute.xlu0 %760
        %v764 = vcombine.high %v756, %v756
        %vm765 = vcmask 31744
        %v767 = vsel %vm765, %v755, 0
        %vm769 = vcmask 1043456
        %v770 = vsel %vm769, %v756, 0
        %v772 = vsel %vm769, %v764, 0
        %774 = vmatprep.subr.mxu0 %v772
        %775 = vmatpush1.msra.mxu0 %v770
        %776 = vmatprep.subr.mxu0 0.0
        %777 = vmatpush1.msra.mxu0 0.0
        %778 = vmatprep.subr.mxu0 0.0
        %779 = vmatpush1.msra.mxu0 0.0
        %780 = vmatprep.subr.mxu0 0.0
        %781 = vmatpush1.msra.mxu0 0.0
        %782 = vmatprep.subr.mxu0 0.0
        %783 = vmatpush1.msra.mxu0 0.0
        %784 = vmatprep.subr.mxu0 0.0
        %785 = vmatpush1.msra.mxu0 0.0
        %786 = vmatprep.subr.mxu0 0.0
        %787 = vmatpush1.msra.mxu0 0.0
        %788 = vmatprep.subr.mxu0 0.0
        %789 = vmatpush1.msra.mxu0 0.0
        %790 = vmatprep.subr.mxu0 0.0
        %791 = vmatpush1.msra.mxu0 0.0
        %792 = vmatprep.subr.mxu0 0.0
        %793 = vmatpush1.msra.mxu0 0.0
        %794 = vmatprep.subr.mxu0 0.0
        %795 = vmatpush1.msra.mxu0 0.0
        %796 = vmatprep.subr.mxu0 0.0
        %797 = vmatpush1.msra.mxu0 0.0
        %798 = vmatprep.subr.mxu0 0.0
        %799 = vmatpush1.msra.mxu0 0.0
        %800 = vmatprep.subr.mxu0 0.0
        %801 = vmatpush1.msra.mxu0 0.0
        %802 = vmatprep.subr.mxu0 0.0
        %803 = vmatpush1.msra.mxu0 0.0
        %804 = vmatprep.subr.mxu0 0.0
        %805 = vmatpush1.msra.mxu0 0.0
        %806 = vmatprep.subr.mxu0 0.0
        %807 = vmatpush1.msra.mxu0 0.0
        %808 = vmatprep.subr.mxu0 0.0
        %809 = vmatpush1.msra.mxu0 0.0
        %810 = vmatprep.subr.mxu0 0.0
        %811 = vmatpush1.msra.mxu0 0.0
        %812 = vmatprep.subr.mxu0 0.0
        %813 = vmatpush1.msra.mxu0 0.0
        %814 = vmatprep.subr.mxu0 0.0
        %815 = vmatpush1.msra.mxu0 0.0
        %816 = vmatprep.subr.mxu0 0.0
        %817 = vmatpush1.msra.mxu0 0.0
        %818 = vmatprep.subr.mxu0 0.0
        %819 = vmatpush1.msra.mxu0 0.0
        %820 = vmatprep.subr.mxu0 0.0
        %821 = vmatpush1.msra.mxu0 0.0
        %822 = vmatprep.subr.mxu0 0.0
        %823 = vmatpush1.msra.mxu0 0.0
        %824 = vmatprep.subr.mxu0 0.0
        %825 = vmatpush1.msra.mxu0 0.0
        %826 = vmatprep.subr.mxu0 0.0
        %827 = vmatpush1.msra.mxu0 0.0
        %828 = vmatprep.subr.mxu0 0.0
        %829 = vmatpush1.msra.mxu0 0.0
        %830 = vmatprep.subr.mxu0 0.0
        %831 = vmatpush1.msra.mxu0 0.0
        %832 = vmatprep.subr.mxu0 0.0
        %833 = vmatpush1.msra.mxu0 0.0
        %834 = vmatprep.subr.mxu0 0.0
        %835 = vmatpush1.msra.mxu0 0.0
        %836 = vmatprep.subr.mxu0 0.0
        %837 = vmatpush1.msra.mxu0 0.0
        %838 = vmatprep.mubr.f32.mxu0 0.0
        %839 = vmatmul.mubr.f32.gmra.mrb[0].mxu0 %v767
        %v840 = vpop.f32.mrb[0].mxu0
        %v841 = vadd.f32 %v761, %v840
        %v842 = vpop.f32.mrb[0].mxu0
        %v843 = vadd.f32 %v761, %v842
        %844 = vdwg.mxu0
        %v845 = vmax.f32 %v841, 0.0
        %v846 = vmax.f32 %v843, 0.0
        %v847 = vld [vmem:[%s6] sm:$0xff]
        %v848 = vld [vmem:[%s630] sm:$0xff]
        %v849 = vld [vmem:[%s630 + $0x8] sm:$0xff]
        %v850 = vld [vmem:[%s11] sm:$0xff]
        %852 = vset.pattern.permute.xlu0 0
        %853 = vperm.xlu0 %852, %v850
        %v854 = vpop.permute.xlu0 %853
        %vm856 = vcmask 64512
        %v858 = vsel %vm856, %v847, 0
        %860 = vmatprep.subr.mxu0 %v849
        %861 = vmatpush1.msra.mxu0 %v848
        %862 = vmatprep.subr.mxu0 0.0
        %863 = vmatpush1.msra.mxu0 0.0
        %864 = vmatprep.subr.mxu0 0.0
        %865 = vmatpush1.msra.mxu0 0.0
        %866 = vmatprep.subr.mxu0 0.0
        %867 = vmatpush1.msra.mxu0 0.0
        %868 = vmatprep.subr.mxu0 0.0
        %869 = vmatpush1.msra.mxu0 0.0
        %870 = vmatprep.subr.mxu0 0.0
        %871 = vmatpush1.msra.mxu0 0.0
        %872 = vmatprep.subr.mxu0 0.0
        %873 = vmatpush1.msra.mxu0 0.0
        %874 = vmatprep.subr.mxu0 0.0
        %875 = vmatpush1.msra.mxu0 0.0
        %876 = vmatprep.subr.mxu0 0.0
        %877 = vmatpush1.msra.mxu0 0.0
        %878 = vmatprep.subr.mxu0 0.0
        %879 = vmatpush1.msra.mxu0 0.0
        %880 = vmatprep.subr.mxu0 0.0
        %881 = vmatpush1.msra.mxu0 0.0
        %882 = vmatprep.subr.mxu0 0.0
        %883 = vmatpush1.msra.mxu0 0.0
        %884 = vmatprep.subr.mxu0 0.0
        %885 = vmatpush1.msra.mxu0 0.0
        %886 = vmatprep.subr.mxu0 0.0
        %887 = vmatpush1.msra.mxu0 0.0
        %888 = vmatprep.subr.mxu0 0.0
        %889 = vmatpush1.msra.mxu0 0.0
        %890 = vmatprep.subr.mxu0 0.0
        %891 = vmatpush1.msra.mxu0 0.0
        %892 = vmatprep.subr.mxu0 0.0
        %893 = vmatpush1.msra.mxu0 0.0
        %894 = vmatprep.subr.mxu0 0.0
        %895 = vmatpush1.msra.mxu0 0.0
        %896 = vmatprep.subr.mxu0 0.0
        %897 = vmatpush1.msra.mxu0 0.0
        %898 = vmatprep.subr.mxu0 0.0
        %899 = vmatpush1.msra.mxu0 0.0
        %900 = vmatprep.subr.mxu0 0.0
        %901 = vmatpush1.msra.mxu0 0.0
        %902 = vmatprep.subr.mxu0 0.0
        %903 = vmatpush1.msra.mxu0 0.0
        %904 = vmatprep.subr.mxu0 0.0
        %905 = vmatpush1.msra.mxu0 0.0
        %906 = vmatprep.subr.mxu0 0.0
        %907 = vmatpush1.msra.mxu0 0.0
        %908 = vmatprep.subr.mxu0 0.0
        %909 = vmatpush1.msra.mxu0 0.0
        %910 = vmatprep.subr.mxu0 0.0
        %911 = vmatpush1.msra.mxu0 0.0
        %912 = vmatprep.subr.mxu0 0.0
        %913 = vmatpush1.msra.mxu0 0.0
        %914 = vmatprep.subr.mxu0 0.0
        %915 = vmatpush1.msra.mxu0 0.0
        %916 = vmatprep.subr.mxu0 0.0
        %917 = vmatpush1.msra.mxu0 0.0
        %918 = vmatprep.subr.mxu0 0.0
        %919 = vmatpush1.msra.mxu0 0.0
        %920 = vmatprep.subr.mxu0 0.0
        %921 = vmatpush1.msra.mxu0 0.0
        %922 = vmatprep.subr.mxu0 0.0
        %923 = vmatpush1.msra.mxu0 0.0
        %924 = vmatprep.mubr.f32.mxu0 0.0
        %925 = vmatmul.mubr.f32.gmra.mrb[0].mxu0 %v858
        %v926 = vpop.f32.mrb[0].mxu0
        %v927 = vadd.f32 %v854, %v926
        %v928 = vpop.f32.mrb[0].mxu0
        %v929 = vadd.f32 %v854, %v928
        %930 = vdwg.mxu0
        %v931 = vmax.f32 %v927, 0.0
        %v932 = vmax.f32 %v929, 0.0
        %v933 = vadd.f32 %v845, %v931
        %v934 = vadd.f32 %v846, %v932
        %v935 = vld [vmem:[%s7] sm:$0xff]
        %v936 = vld [vmem:[%s750] sm:$0xff]
        %v937 = vld [vmem:[%s750 + $0x8] sm:$0xff]
        %v938 = vld [vmem:[%s750 + $0x10] sm:$0xff]
        %v939 = vld [vmem:[%s750 + $0x18] sm:$0xff]
        %v940 = vld [vmem:[%s12] sm:$0xff]
        %942 = vset.pattern.permute.xlu0 0
        %943 = vperm.xlu0 %942, %v940
        %v944 = vpop.permute.xlu0 %943
        %vm946 = vcmask 130048
        %v948 = vsel %vm946, %v935, 0
        %950 = vmatprep.subr.mxu0 %v937
        %951 = vmatpush1.msra.mxu0 %v936
        %952 = vmatprep.subr.mxu0 %v939
        %953 = vmatpush1.msra.mxu0 %v938
        %954 = vmatprep.subr.mxu0 0.0
        %955 = vmatpush1.msra.mxu0 0.0
        %956 = vmatprep.subr.mxu0 0.0
        %957 = vmatpush1.msra.mxu0 0.0
        %958 = vmatprep.subr.mxu0 0.0
        %959 = vmatpush1.msra.mxu0 0.0
        %960 = vmatprep.subr.mxu0 0.0
        %961 = vmatpush1.msra.mxu0 0.0
        %962 = vmatprep.subr.mxu0 0.0
        %963 = vmatpush1.msra.mxu0 0.0
        %964 = vmatprep.subr.mxu0 0.0
        %965 = vmatpush1.msra.mxu0 0.0
        %966 = vmatprep.subr.mxu0 0.0
        %967 = vmatpush1.msra.mxu0 0.0
        %968 = vmatprep.subr.mxu0 0.0
        %969 = vmatpush1.msra.mxu0 0.0
        %970 = vmatprep.subr.mxu0 0.0
        %971 = vmatpush1.msra.mxu0 0.0
        %972 = vmatprep.subr.mxu0 0.0
        %973 = vmatpush1.msra.mxu0 0.0
        %974 = vmatprep.subr.mxu0 0.0
        %975 = vmatpush1.msra.mxu0 0.0
        %976 = vmatprep.subr.mxu0 0.0
        %977 = vmatpush1.msra.mxu0 0.0
        %978 = vmatprep.subr.mxu0 0.0
        %979 = vmatpush1.msra.mxu0 0.0
        %980 = vmatprep.subr.mxu0 0.0
        %981 = vmatpush1.msra.mxu0 0.0
        %982 = vmatprep.subr.mxu0 0.0
        %983 = vmatpush1.msra.mxu0 0.0
        %984 = vmatprep.subr.mxu0 0.0
        %985 = vmatpush1.msra.mxu0 0.0
        %986 = vmatprep.subr.mxu0 0.0
        %987 = vmatpush1.msra.mxu0 0.0
        %988 = vmatprep.subr.mxu0 0.0
        %989 = vmatpush1.msra.mxu0 0.0
        %990 = vmatprep.subr.mxu0 0.0
        %991 = vmatpush1.msra.mxu0 0.0
        %992 = vmatprep.subr.mxu0 0.0
        %993 = vmatpush1.msra.mxu0 0.0
        %994 = vmatprep.subr.mxu0 0.0
        %995 = vmatpush1.msra.mxu0 0.0
        %996 = vmatprep.subr.mxu0 0.0
        %997 = vmatpush1.msra.mxu0 0.0
        %998 = vmatprep.subr.mxu0 0.0
        %999 = vmatpush1.msra.mxu0 0.0
        %1000 = vmatprep.subr.mxu0 0.0
        %1001 = vmatpush1.msra.mxu0 0.0
        %1002 = vmatprep.subr.mxu0 0.0
        %1003 = vmatpush1.msra.mxu0 0.0
        %1004 = vmatprep.subr.mxu0 0.0
        %1005 = vmatpush1.msra.mxu0 0.0
        %1006 = vmatprep.subr.mxu0 0.0
        %1007 = vmatpush1.msra.mxu0 0.0
        %1008 = vmatprep.subr.mxu0 0.0
        %1009 = vmatpush1.msra.mxu0 0.0
        %1010 = vmatprep.subr.mxu0 0.0
        %1011 = vmatpush1.msra.mxu0 0.0
        %1012 = vmatprep.subr.mxu0 0.0
        %1013 = vmatpush1.msra.mxu0 0.0
        %1014 = vmatprep.mubr.f32.mxu0 0.0
        %1015 = vmatmul.mubr.f32.gmra.mrb[0].mxu0 %v948
        %v1016 = vpop.f32.mrb[0].mxu0
        %v1017 = vadd.f32 %v944, %v1016
        %v1018 = vpop.f32.mrb[0].mxu0
        %v1019 = vadd.f32 %v944, %v1018
        %1020 = vdwg.mxu0
        %v1021 = vmax.f32 %v1017, 0.0
        %v1022 = vmax.f32 %v1019, 0.0
        %v1023 = vadd.f32 %v933, %v1021
        %v1024 = vadd.f32 %v934, %v1022
        %v1025 = vld [vmem:[#allocation9] sm:$0xff]
        %v1026 = vld [vmem:[%s639] sm:$0xff]
        %v1027 = vld [vmem:[%s639 + $0x8] sm:$0xff]
        %v1028 = vld [vmem:[%s13] sm:$0xff]
        %1030 = vset.pattern.permute.xlu0 0
        %1031 = vperm.xlu0 %1030, %v1028
        %v1032 = vpop.permute.xlu0 %1031
        %v1035 = vsel %vm856, %v1025, 0
        %1037 = vmatprep.subr.mxu0 %v1027
        %1038 = vmatpush1.msra.mxu0 %v1026
        %1039 = vmatprep.subr.mxu0 0.0
        %1040 = vmatpush1.msra.mxu0 0.0
        %1041 = vmatprep.subr.mxu0 0.0
        %1042 = vmatpush1.msra.mxu0 0.0
        %1043 = vmatprep.subr.mxu0 0.0
        %1044 = vmatpush1.msra.mxu0 0.0
        %1045 = vmatprep.subr.mxu0 0.0
        %1046 = vmatpush1.msra.mxu0 0.0
        %1047 = vmatprep.subr.mxu0 0.0
        %1048 = vmatpush1.msra.mxu0 0.0
        %1049 = vmatprep.subr.mxu0 0.0
        %1050 = vmatpush1.msra.mxu0 0.0
        %1051 = vmatprep.subr.mxu0 0.0
        %1052 = vmatpush1.msra.mxu0 0.0
        %1053 = vmatprep.subr.mxu0 0.0
        %1054 = vmatpush1.msra.mxu0 0.0
        %1055 = vmatprep.subr.mxu0 0.0
        %1056 = vmatpush1.msra.mxu0 0.0
        %1057 = vmatprep.subr.mxu0 0.0
        %1058 = vmatpush1.msra.mxu0 0.0
        %1059 = vmatprep.subr.mxu0 0.0
        %1060 = vmatpush1.msra.mxu0 0.0
        %1061 = vmatprep.subr.mxu0 0.0
        %1062 = vmatpush1.msra.mxu0 0.0
        %1063 = vmatprep.subr.mxu0 0.0
        %1064 = vmatpush1.msra.mxu0 0.0
        %1065 = vmatprep.subr.mxu0 0.0
        %1066 = vmatpush1.msra.mxu0 0.0
        %1067 = vmatprep.subr.mxu0 0.0
        %1068 = vmatpush1.msra.mxu0 0.0
        %1069 = vmatprep.subr.mxu0 0.0
        %1070 = vmatpush1.msra.mxu0 0.0
        %1071 = vmatprep.subr.mxu0 0.0
        %1072 = vmatpush1.msra.mxu0 0.0
        %1073 = vmatprep.subr.mxu0 0.0
        %1074 = vmatpush1.msra.mxu0 0.0
        %1075 = vmatprep.subr.mxu0 0.0
        %1076 = vmatpush1.msra.mxu0 0.0
        %1077 = vmatprep.subr.mxu0 0.0
        %1078 = vmatpush1.msra.mxu0 0.0
        %1079 = vmatprep.subr.mxu0 0.0
        %1080 = vmatpush1.msra.mxu0 0.0
        %1081 = vmatprep.subr.mxu0 0.0
        %1082 = vmatpush1.msra.mxu0 0.0
        %1083 = vmatprep.subr.mxu0 0.0
        %1084 = vmatpush1.msra.mxu0 0.0
        %1085 = vmatprep.subr.mxu0 0.0
        %1086 = vmatpush1.msra.mxu0 0.0
        %1087 = vmatprep.subr.mxu0 0.0
        %1088 = vmatpush1.msra.mxu0 0.0
        %1089 = vmatprep.subr.mxu0 0.0
        %1090 = vmatpush1.msra.mxu0 0.0
        %1091 = vmatprep.subr.mxu0 0.0
        %1092 = vmatpush1.msra.mxu0 0.0
        %1093 = vmatprep.subr.mxu0 0.0
        %1094 = vmatpush1.msra.mxu0 0.0
        %1095 = vmatprep.subr.mxu0 0.0
        %1096 = vmatpush1.msra.mxu0 0.0
        %1097 = vmatprep.subr.mxu0 0.0
        %1098 = vmatpush1.msra.mxu0 0.0
        %1099 = vmatprep.subr.mxu0 0.0
        %1100 = vmatpush1.msra.mxu0 0.0
        %1101 = vmatprep.mubr.f32.mxu0 0.0
        %1102 = vmatmul.mubr.f32.gmra.mrb[0].mxu0 %v1035
        %v1103 = vpop.f32.mrb[0].mxu0
        %v1104 = vadd.f32 %v1032, %v1103
        %v1105 = vpop.f32.mrb[0].mxu0
        %v1106 = vadd.f32 %v1032, %v1105
        %1107 = vdwg.mxu0
        %v1108 = vmax.f32 %v1104, 0.0
        %v1109 = vmax.f32 %v1106, 0.0
        %v1110 = vadd.f32 %v1023, %v1108
        %v1111 = vadd.f32 %v1024, %v1109
        %v1112 = vld [vmem:[%s9] sm:$0xff]
        %v1113 = vld [vmem:[%s648] sm:$0xff]
        %v1114 = vld [vmem:[%s14] sm:$0xff]
        %1116 = vset.pattern.permute.xlu0 0
        %1117 = vperm.xlu0 %1116, %v1114
        %v1118 = vpop.permute.xlu0 %1117
        %v1121 = vcombine.high %v1113, %v1113
        %v1123 = vsel %vm765, %v1112, 0
        %v1125 = vsel %vm769, %v1113, 0
        %v1127 = vsel %vm769, %v1121, 0
        %1129 = vmatprep.subr.mxu0 %v1127
        %1130 = vmatpush1.msra.mxu0 %v1125
        %1131 = vmatprep.subr.mxu0 0.0
        %1132 = vmatpush1.msra.mxu0 0.0
        %1133 = vmatprep.subr.mxu0 0.0
        %1134 = vmatpush1.msra.mxu0 0.0
        %1135 = vmatprep.subr.mxu0 0.0
        %1136 = vmatpush1.msra.mxu0 0.0
        %1137 = vmatprep.subr.mxu0 0.0
        %1138 = vmatpush1.msra.mxu0 0.0
        %1139 = vmatprep.subr.mxu0 0.0
        %1140 = vmatpush1.msra.mxu0 0.0
        %1141 = vmatprep.subr.mxu0 0.0
        %1142 = vmatpush1.msra.mxu0 0.0
        %1143 = vmatprep.subr.mxu0 0.0
        %1144 = vmatpush1.msra.mxu0 0.0
        %1145 = vmatprep.subr.mxu0 0.0
        %1146 = vmatpush1.msra.mxu0 0.0
        %1147 = vmatprep.subr.mxu0 0.0
        %1148 = vmatpush1.msra.mxu0 0.0
        %1149 = vmatprep.subr.mxu0 0.0
        %1150 = vmatpush1.msra.mxu0 0.0
        %1151 = vmatprep.subr.mxu0 0.0
        %1152 = vmatpush1.msra.mxu0 0.0
        %1153 = vmatprep.subr.mxu0 0.0
        %1154 = vmatpush1.msra.mxu0 0.0
        %1155 = vmatprep.subr.mxu0 0.0
        %1156 = vmatpush1.msra.mxu0 0.0
        %1157 = vmatprep.subr.mxu0 0.0
        %1158 = vmatpush1.msra.mxu0 0.0
        %1159 = vmatprep.subr.mxu0 0.0
        %1160 = vmatpush1.msra.mxu0 0.0
        %1161 = vmatprep.subr.mxu0 0.0
        %1162 = vmatpush1.msra.mxu0 0.0
        %1163 = vmatprep.subr.mxu0 0.0
        %1164 = vmatpush1.msra.mxu0 0.0
        %1165 = vmatprep.subr.mxu0 0.0
        %1166 = vmatpush1.msra.mxu0 0.0
        %1167 = vmatprep.subr.mxu0 0.0
        %1168 = vmatpush1.msra.mxu0 0.0
        %1169 = vmatprep.subr.mxu0 0.0
        %1170 = vmatpush1.msra.mxu0 0.0
        %1171 = vmatprep.subr.mxu0 0.0
        %1172 = vmatpush1.msra.mxu0 0.0
        %1173 = vmatprep.subr.mxu0 0.0
        %1174 = vmatpush1.msra.mxu0 0.0
        %1175 = vmatprep.subr.mxu0 0.0
        %1176 = vmatpush1.msra.mxu0 0.0
        %1177 = vmatprep.subr.mxu0 0.0
        %1178 = vmatpush1.msra.mxu0 0.0
        %1179 = vmatprep.subr.mxu0 0.0
        %1180 = vmatpush1.msra.mxu0 0.0
        %1181 = vmatprep.subr.mxu0 0.0
        %1182 = vmatpush1.msra.mxu0 0.0
        %1183 = vmatprep.subr.mxu0 0.0
        %1184 = vmatpush1.msra.mxu0 0.0
        %1185 = vmatprep.subr.mxu0 0.0
        %1186 = vmatpush1.msra.mxu0 0.0
        %1187 = vmatprep.subr.mxu0 0.0
        %1188 = vmatpush1.msra.mxu0 0.0
        %1189 = vmatprep.subr.mxu0 0.0
        %1190 = vmatpush1.msra.mxu0 0.0
        %1191 = vmatprep.subr.mxu0 0.0
        %1192 = vmatpush1.msra.mxu0 0.0
        %1193 = vmatprep.mubr.f32.mxu0 0.0
        %1194 = vmatmul.mubr.f32.gmra.mrb[0].mxu0 %v1123
        %v1195 = vpop.f32.mrb[0].mxu0
        %v1196 = vadd.f32 %v1118, %v1195
        %v1197 = vpop.f32.mrb[0].mxu0
        %v1198 = vadd.f32 %v1118, %v1197
        %1199 = vdwg.mxu0
        %v1200 = vmax.f32 %v1196, 0.0
        %v1201 = vmax.f32 %v1198, 0.0
        %v1202 = vadd.f32 %v1110, %v1200
        %v1203 = vadd.f32 %v1111, %v1201
        %v1204 = vld [vmem:[%s15] sm:$0x1]
        %v1205 = vld [vmem:[#allocation2] sm:$0x1]
        %1207 = vset.pattern.permute.xlu0 0
        %1208 = vperm.xlu0 %1207, %v1205
        %v1209 = vpop.permute.xlu0 %1208
        %v1211 = vlaneseq
        %v1212 = vshrl.u32 %v1211, 7
        %v1213 = vsub.s32 0, %v1212
        %v1214 = vrot.slane %v1209, %v1213
        %v1216 = vsel %vm856, %v1204, 0
        %1218 = vmatprep.subr.mxu0 %v1203
        %1219 = vmatpush1.msra.mxu0 %v1202
        %1220 = vmatprep.subr.mxu0 0.0
        %1221 = vmatpush1.msra.mxu0 0.0
        %1222 = vmatprep.subr.mxu0 0.0
        %1223 = vmatpush1.msra.mxu0 0.0
        %1224 = vmatprep.subr.mxu0 0.0
        %1225 = vmatpush1.msra.mxu0 0.0
        %1226 = vmatprep.subr.mxu0 0.0
        %1227 = vmatpush1.msra.mxu0 0.0
        %1228 = vmatprep.subr.mxu0 0.0
        %1229 = vmatpush1.msra.mxu0 0.0
        %1230 = vmatprep.subr.mxu0 0.0
        %1231 = vmatpush1.msra.mxu0 0.0
        %1232 = vmatprep.subr.mxu0 0.0
        %1233 = vmatpush1.msra.mxu0 0.0
        %1234 = vmatprep.subr.mxu0 0.0
        %1235 = vmatpush1.msra.mxu0 0.0
        %1236 = vmatprep.subr.mxu0 0.0
        %1237 = vmatpush1.msra.mxu0 0.0
        %1238 = vmatprep.subr.mxu0 0.0
        %1239 = vmatpush1.msra.mxu0 0.0
        %1240 = vmatprep.subr.mxu0 0.0
        %1241 = vmatpush1.msra.mxu0 0.0
        %1242 = vmatprep.subr.mxu0 0.0
        %1243 = vmatpush1.msra.mxu0 0.0
        %1244 = vmatprep.subr.mxu0 0.0
        %1245 = vmatpush1.msra.mxu0 0.0
        %1246 = vmatprep.subr.mxu0 0.0
        %1247 = vmatpush1.msra.mxu0 0.0
        %1248 = vmatprep.subr.mxu0 0.0
        %1249 = vmatpush1.msra.mxu0 0.0
        %1250 = vmatprep.subr.mxu0 0.0
        %1251 = vmatpush1.msra.mxu0 0.0
        %1252 = vmatprep.subr.mxu0 0.0
        %1253 = vmatpush1.msra.mxu0 0.0
        %1254 = vmatprep.subr.mxu0 0.0
        %1255 = vmatpush1.msra.mxu0 0.0
        %1256 = vmatprep.subr.mxu0 0.0
        %1257 = vmatpush1.msra.mxu0 0.0
        %1258 = vmatprep.subr.mxu0 0.0
        %1259 = vmatpush1.msra.mxu0 0.0
        %1260 = vmatprep.subr.mxu0 0.0
        %1261 = vmatpush1.msra.mxu0 0.0
        %1262 = vmatprep.subr.mxu0 0.0
        %1263 = vmatpush1.msra.mxu0 0.0
        %1264 = vmatprep.subr.mxu0 0.0
        %1265 = vmatpush1.msra.mxu0 0.0
        %1266 = vmatprep.subr.mxu0 0.0
        %1267 = vmatpush1.msra.mxu0 0.0
        %1268 = vmatprep.subr.mxu0 0.0
        %1269 = vmatpush1.msra.mxu0 0.0
        %1270 = vmatprep.subr.mxu0 0.0
        %1271 = vmatpush1.msra.mxu0 0.0
        %1272 = vmatprep.subr.mxu0 0.0
        %1273 = vmatpush1.msra.mxu0 0.0
        %1274 = vmatprep.subr.mxu0 0.0
        %1275 = vmatpush1.msra.mxu0 0.0
        %1276 = vmatprep.subr.mxu0 0.0
        %1277 = vmatpush1.msra.mxu0 0.0
        %1278 = vmatprep.subr.mxu0 0.0
        %1279 = vmatpush1.msra.mxu0 0.0
        %1280 = vmatprep.subr.mxu0 0.0
        %1281 = vmatpush1.msra.mxu0 0.0
        %1282 = vmatprep.mubr.f32.mxu0 0.0
        %1283 = vmatmul.mubr.f32.gmra.mrb[0].mxu0 %v1216
        %v1284 = vpop.f32.mrb[0].mxu0
        %v1285 = vadd.f32 %v1214, %v1284
        %v1286 = vpop.f32.mrb[0].mxu0
        %v1287 = vadd.f32 %v1214, %v1286
        %1288 = vdwg.mxu0
        %v1289 = vxor.u32 %v1285, 2147483648
        %v1290 = vxor.u32 %v1287, 2147483648
        %v1291 = vmul.f32 %v1289, 1.442695
        %v1292 = vpow.pop %v1291
        %v1293 = vmul.f32 %v1290, 1.442695
        %v1294 = vpow.pop %v1293
        %v1295 = vadd.f32 %v1292, 1.0
        %v1296 = vadd.f32 %v1294, 1.0
        %v1297 = vrcp.pop %v1295
        %v1298 = vmul.f32 1.0, %v1297
        %v1299 = vrcp.pop %v1296
        %v1300 = vmul.f32 1.0, %v1299
        %v1301 = vlaneseq
        %v1302 = vshrl.u32 %v1301, 7
        %v1303 = vsub.s32 0, %v1302
        %v1304 = vrot.slane %v1298, %v1303
        %v1305 = vlaneseq
        %v1306 = vshrl.u32 %v1305, 7
        %v1307 = vsub.s32 0, %v1306
        %v1308 = vrot.slane %v1300, %v1307
        %v1311 = vcombine.low %v1304, %v1308
        %v1313 = vmul.f32 %v756, %v1311
        %1314 = vst [vmem:[%s730] sm:$0xff] %v1313
        %s1315 = sand.u32 %s454, 1
        %s1316 = scalar_lea.sflag [#allocation5], %s1315
        %s1317 = sand.u32 %s454, 1
        %s1318 = smul.addr %s1317, 8
        %s1319 = scalar_lea.vmem [#allocation11], %s1318
        // Predicated region
        $region105: #{tpu_custom_call.1} parent=87 // pred_check
          %p1320 = pneg %p464
        $region106: #{tpu_custom_call.1} parent=87 // pred_check_branch
          %1322 = sbr.rel (%p1320) target = $region108
        $region107: #{tpu_custom_call.1} parent=87 // pred_region
          %s1323 = smul.u32 2, %s45
          %s1325 = ssub.s32 128, 128
          %1326 = vsyncadd %s1316, %s1325
          %s1327 = smul.addr %s44, 2
          %s1328 = sadd.s32 %s1323, %s1327
          %s1329 = smul.addr %s1328, 64
          %s1330 = scalar_lea.hbm %s17, %s1329
          %s1332 = sshll.u32 %s1319, 4
          %s1333 = int_to_ptr.vmem [resolvable:$true] %s1332
          %1335 = dma.vmem_to_hbm [thread:$0]  %s1333, 128, %s1330, %s1316
        $region108: #{tpu_custom_call.1} parent=87 // pred_fallthru
          _
      $region88: #{tpu_custom_call.1} parent=5 // pred_fallthru
        _
      %p1336 = scmp.le.s32.totalorder 2, %s35
      // Predicated region
      $region109: #{tpu_custom_call.1} parent=5 // pred_check
        %p1337 = pneg %p1336
      $region110: #{tpu_custom_call.1} parent=5 // pred_check_branch
        %1339 = sbr.rel (%p1337) target = $region112
      $region111: #{tpu_custom_call.1} parent=5 // pred_region
        %s1340 = ssub.s32 %s35, 2
        // Predicated region
        $region113: #{tpu_custom_call.1} parent=111 // pred_check
          %p1341 = pneg %p470
        $region114: #{tpu_custom_call.1} parent=111 // pred_check_branch
          %1343 = sbr.rel (%p1341) target = $region116
        $region115: #{tpu_custom_call.1} parent=111 // pred_region
          %s1344 = sand.u32 %s455, 1
          %s1345 = scalar_lea.sflag [#allocation5], %s1344
          %s1346 = sand.u32 %s455, 1
          %s1347 = smul.addr %s1346, 8
          %s1348 = scalar_lea.vmem [#allocation11], %s1347
          %1349 = dma.done %s1345, 128
        $region116: #{tpu_custom_call.1} parent=111 // pred_fallthru
          _
      $region112: #{tpu_custom_call.1} parent=5 // pred_fallthru
        _
    $region6: #{tpu_custom_call.1} parent=1 // loop_footer
      %s39 = sadd.s32 1, %s35
    $region7: #{tpu_custom_call.1} parent=1 // loop_footer_branch
      %34 = sbr.rel target = $region3
    $region8: #{tpu_custom_call.1} parent=1 // loop_exit
      _
    %1350 = vsyncpa [#allocation4], 1
    %s1351 = scalar_lea.sflag [#allocation4], 1
    %1352 = vsyncpa %s1351, 1
    %1353 = vsyncpa [#allocation7], 1
    %s1354 = scalar_lea.sflag [#allocation7], 1
    %1355 = vsyncpa %s1354, 1
    %1356 = vsyncpa [#allocation10], 1
    %1357 = vsyncpa [#allocation5], 1
    %s1358 = scalar_lea.sflag [#allocation5], 1
    %1359 = vsyncpa %s1358, 1

</llo_original>
